<compile_context>
chip_gen: v6e
topology: v6e:2x2x1
jax: 0.10.0
libtpu: 0.0.40
codegen_flags: <defaults>
</compile_context>

<pallas_src>
import jax
import jax.numpy as jnp
from jax import lax
from jax.experimental import pallas as pl
from jax.experimental.pallas import tpu as pltpu

# small synthetic config (real clip-vit-base-patch32: D=512, H=8, 12 layers,
# vocab=49408, max_pos=77, proj=512)
B, S = 2, 8
D, H, LAYERS = 32, 4, 2
DH = D // H
FF = 4 * D
VOCAB = 64
PROJ = 32
EPS = 1e-5


def _layer_norm(x, w, b):
    mu = jnp.mean(x, axis=-1, keepdims=True)
    var = jnp.mean(jnp.square(x - mu), axis=-1, keepdims=True)
    return (x - mu) * lax.rsqrt(var + EPS) * w + b


# ----------------------------- Pallas kernel --------------------------------
def clip_text_kernel(eot_ref,                      # SMEM (B,) int32 EOT positions
                     x_ref,                        # (S, D) f32 embeddings of this sequence
                     ln1w_ref, ln1b_ref,           # (1, D) f32
                     wqkv_ref, bqkv_ref,           # (D, 3D) bf16 / (1, 3D) f32, Q pre-scaled
                     wo_ref, bo_ref,               # (D, D) bf16 / (1, D) f32
                     ln2w_ref, ln2b_ref,           # (1, D) f32
                     wfc1_ref, bfc1_ref,           # (D, FF) bf16 / (1, FF) f32
                     wfc2_ref, bfc2_ref,           # (FF, D) bf16 / (1, D) f32
                     lnfw_ref, lnfb_ref,           # (1, D) f32 final LN
                     projw_ref,                    # (D, PROJ) bf16 text projection
                     out_ref,                      # (1, PROJ) f32
                     act_ref, ctx_ref):            # VMEM scratch, (S, D) f32 each
    b = pl.program_id(0)
    l = pl.program_id(1)

    @pl.when(l == 0)
    def _():                                       # load this sequence once
        act_ref[...] = x_ref[...]

    x = act_ref[...]                               # (S, D) residual stream (f32)
    h = _layer_norm(x, ln1w_ref[...], ln1b_ref[...])

    # fused QKV projection: one GEMM, bf16 operands, f32 accumulation
    qkv = jnp.dot(h.astype(jnp.bfloat16), wqkv_ref[...],
                  preferred_element_type=jnp.float32) + bqkv_ref[...]   # (S, 3D)

    # additive causal mask, built once and reused by every head
    rows = lax.broadcasted_iota(jnp.int32, (S, S), 0)
    cols = lax.broadcasted_iota(jnp.int32, (S, S), 1)
    neg = jnp.where(cols <= rows, 0.0, -1e9).astype(jnp.float32)

    for hd in range(H):                            # static unroll (H small)
        qh = qkv[:, hd * DH:(hd + 1) * DH]         # (S, DH), already * DH**-0.5
        kh = qkv[:, D + hd * DH:D + (hd + 1) * DH]
        vh = qkv[:, 2 * D + hd * DH:2 * D + (hd + 1) * DH]
        s = jnp.einsum('qe,ke->qk', qh, kh,
                       preferred_element_type=jnp.float32) + neg
        s = s - jnp.max(s, axis=-1, keepdims=True)
        p = jnp.exp(s)
        p = p * pl.reciprocal(jnp.sum(p, axis=-1, keepdims=True), approx=True)
        ctx_ref[:, hd * DH:(hd + 1) * DH] = jnp.dot(
            p, vh, preferred_element_type=jnp.float32)

    # single fused output projection over all heads
    attn = jnp.dot(ctx_ref[...].astype(jnp.bfloat16), wo_ref[...],
                   preferred_element_type=jnp.float32) + bo_ref[...]
    x = x + attn                                   # residual 1

    h2 = _layer_norm(x, ln2w_ref[...], ln2b_ref[...])
    f = jnp.dot(h2.astype(jnp.bfloat16), wfc1_ref[...],
                preferred_element_type=jnp.float32) + bfc1_ref[...]
    f = f * jax.nn.sigmoid(1.702 * f)              # quickGELU (f32)
    f = jnp.dot(f.astype(jnp.bfloat16), wfc2_ref[...],
                preferred_element_type=jnp.float32) + bfc2_ref[...]
    act_ref[...] = x + f                           # residual 2 (stays in VMEM)

    # last layer: fused final LayerNorm + EOT pooling + text projection
    @pl.when(l == pl.num_programs(1) - 1)
    def _():
        r = act_ref[pl.ds(eot_ref[b], 1), :]       # (1, D) hidden state at EOT
        r = _layer_norm(r, lnfw_ref[...], lnfb_ref[...])
        out_ref[...] = jnp.dot(r.astype(jnp.bfloat16), projw_ref[...],
                               preferred_element_type=jnp.float32)


# ------------------------------- wrappers ------------------------------------
def pack_params(params):
    """One-time weight prep: (in,out) layout, fused QKV, Q-scale fold, bf16 cast."""
    scale = jnp.float32(DH) ** -0.5
    layers = params['layers']

    def st(fn, dtype=jnp.float32):
        return jnp.stack([fn(p) for p in layers], axis=0).astype(dtype)

    return dict(
        tok_emb=params['tok_emb'],
        pos_emb=params['pos_emb'],
        ln1_w=st(lambda p: p['ln1_w'].reshape(1, D)),
        ln1_b=st(lambda p: p['ln1_b'].reshape(1, D)),
        w_qkv=st(lambda p: jnp.concatenate(
            [(p['q_w'] * scale).T, p['k_w'].T, p['v_w'].T], axis=1), jnp.bfloat16),
        b_qkv=st(lambda p: jnp.concatenate(
            [p['q_b'] * scale, p['k_b'], p['v_b']]).reshape(1, 3 * D)),
        w_o=st(lambda p: p['o_w'].T, jnp.bfloat16),
        b_o=st(lambda p: p['o_b'].reshape(1, D)),
        ln2_w=st(lambda p: p['ln2_w'].reshape(1, D)),
        ln2_b=st(lambda p: p['ln2_b'].reshape(1, D)),
        w_fc1=st(lambda p: p['fc1_w'].T, jnp.bfloat16),
        b_fc1=st(lambda p: p['fc1_b'].reshape(1, FF)),
        w_fc2=st(lambda p: p['fc2_w'].T, jnp.bfloat16),
        b_fc2=st(lambda p: p['fc2_b'].reshape(1, D)),
        lnf_w=params['lnf_w'].reshape(1, D),
        lnf_b=params['lnf_b'].reshape(1, D),
        w_proj=params['proj_w'].T.astype(jnp.bfloat16),
    )


@jax.jit
def clip_text_features(input_ids, pk):
    # glue: embedding gather + EOT argmax in plain JAX (tokenizer output handling)
    x = (pk['tok_emb'][input_ids] + pk['pos_emb'][:S]).astype(jnp.float32)  # (B,S,D)
    eot = jnp.argmax(input_ids, axis=-1).astype(jnp.int32)                  # (B,)

    def wspec(r, c):    # stacked per-layer weight: pick layer l (double-buffered DMA)
        return pl.BlockSpec((None, r, c), lambda b, l, eot_ref: (l, 0, 0))

    def fspec(r, c):    # layer-independent (final LN / projection): stays resident
        return pl.BlockSpec((r, c), lambda b, l, eot_ref: (0, 0))

    in_specs = [
        pl.BlockSpec((None, S, D), lambda b, l, eot_ref: (b, 0, 0)),   # x (per sequence)
        wspec(1, D), wspec(1, D),                                      # ln1
        wspec(D, 3 * D), wspec(1, 3 * D),                              # fused qkv
        wspec(D, D), wspec(1, D),                                      # attn out proj
        wspec(1, D), wspec(1, D),                                      # ln2
        wspec(D, FF), wspec(1, FF),                                    # fc1
        wspec(FF, D), wspec(1, D),                                     # fc2
        fspec(1, D), fspec(1, D),                                      # final LN
        fspec(D, PROJ),                                                # text projection
    ]
    out = pl.pallas_call(
        clip_text_kernel,
        out_shape=jax.ShapeDtypeStruct((B, 1, PROJ), jnp.float32),
        grid_spec=pltpu.PrefetchScalarGridSpec(
            num_scalar_prefetch=1,
            grid=(B, LAYERS),
            in_specs=in_specs,
            out_specs=pl.BlockSpec((None, 1, PROJ), lambda b, l, eot_ref: (b, 0, 0)),
            scratch_shapes=[pltpu.VMEM((S, D), jnp.float32),    # resident activations
                            pltpu.VMEM((S, D), jnp.float32)]),  # per-head ctx assembly
        compiler_params=pltpu.CompilerParams(
            dimension_semantics=("parallel", "arbitrary")),
    )(eot, x,
      pk['ln1_w'], pk['ln1_b'], pk['w_qkv'], pk['b_qkv'], pk['w_o'], pk['b_o'],
      pk['ln2_w'], pk['ln2_b'], pk['w_fc1'], pk['b_fc1'], pk['w_fc2'], pk['b_fc2'],
      pk['lnf_w'], pk['lnf_b'], pk['w_proj'])
    return out.reshape(B, PROJ)


# --------------------------- pure-JAX reference ------------------------------
def ref_text_features(input_ids, params):
    def ln(x, w, b):
        mu = x.mean(-1, keepdims=True)
        var = ((x - mu) ** 2).mean(-1, keepdims=True)
        return (x - mu) / jnp.sqrt(var + EPS) * w + b

    x = params['tok_emb'][input_ids] + params['pos_emb'][:S]
    mask = jnp.tril(jnp.ones((S, S), bool))
    for p in params['layers']:
        h = ln(x, p['ln1_w'], p['ln1_b'])
        q = (h @ p['q_w'].T + p['q_b']).reshape(B, S, H, DH).transpose(0, 2, 1, 3)
        k = (h @ p['k_w'].T + p['k_b']).reshape(B, S, H, DH).transpose(0, 2, 1, 3)
        v = (h @ p['v_w'].T + p['v_b']).reshape(B, S, H, DH).transpose(0, 2, 1, 3)
        s = jnp.einsum('bhqe,bhke->bhqk', q * DH ** -0.5, k)
        s = jnp.where(mask, s, -1e9)
        a = jax.nn.softmax(s, axis=-1)
        ctx = jnp.einsum('bhqk,bhke->bhqe', a, v).transpose(0, 2, 1, 3).reshape(B, S, D)
        x = x + ctx @ p['o_w'].T + p['o_b']
        h2 = ln(x, p['ln2_w'], p['ln2_b'])
        f = h2 @ p['fc1_w'].T + p['fc1_b']
        f = f * jax.nn.sigmoid(1.702 * f)
        x = x + f @ p['fc2_w'].T + p['fc2_b']
    x = ln(x, params['lnf_w'], params['lnf_b'])
    eot = jnp.argmax(input_ids, axis=-1)
    pooled = x[jnp.arange(B), eot]
    return pooled @ params['proj_w'].T


# ------------------------------- params --------------------------------------
def init_params(key):
    ks = iter(jax.random.split(key, 64))

    def w(shape):
        return (jax.random.normal(next(ks), shape) * 0.02).astype(jnp.float32)

    params = {
        'tok_emb': w((VOCAB, D)),
        'pos_emb': w((S, D)),
        'lnf_w': jnp.ones((D,), jnp.float32),
        'lnf_b': jnp.zeros((D,), jnp.float32),
        'proj_w': w((PROJ, D)),        # text_projection (no bias)
        'layers': [],
    }
    for _ in range(LAYERS):
        params['layers'].append({
            'ln1_w': jnp.ones((D,), jnp.float32), 'ln1_b': jnp.zeros((D,), jnp.float32),
            'q_w': w((D, D)), 'q_b': w((D,)),
            'k_w': w((D, D)), 'k_b': w((D,)),
            'v_w': w((D, D)), 'v_b': w((D,)),
            'o_w': w((D, D)), 'o_b': w((D,)),
            'ln2_w': jnp.ones((D,), jnp.float32), 'ln2_b': jnp.zeros((D,), jnp.float32),
            'fc1_w': w((FF, D)), 'fc1_b': w((FF,)),
            'fc2_w': w((D, FF)), 'fc2_b': w((D,)),
        })
    return params


if __name__ == "__main__":
    key = jax.random.PRNGKey(0)
    pkey, ikey = jax.random.split(key)
    params = init_params(pkey)
    packed = pack_params(params)   # one-time weight layout / bf16 prep

    # TODO(synk): CLIPProcessor string tokenization has no Pallas/JAX equivalent;
    # synthetic padded token ids stand in for `processor(text=texts, ...)`.
    input_ids = jax.random.randint(ikey, (B, S), 2, VOCAB - 1)
    input_ids = input_ids.at[:, 0].set(1)            # BOS
    input_ids = input_ids.at[:, -1].set(VOCAB - 1)   # EOT (max id -> argmax pooling)

    feats = jax.block_until_ready(clip_text_features(input_ids, packed))
    ref = ref_text_features(input_ids, params)
    assert feats.shape == (B, PROJ), feats.shape
    err = float(jnp.max(jnp.abs(feats - ref)))
    # kernel runs weight GEMMs with bf16 operands (f32 accumulate); reference is
    # pure f32, so use a mixed-precision tolerance.
    assert err < 2e-2, err
    print("KERNEL_OK")
</pallas_src>

<mosaic_0001>
module attributes {stable_mosaic.version = 11 : i64} {
  func.func @clip_text_kernel(%arg0: i32, %arg1: i32, %arg2: memref<2xi32, #tpu.memory_space<smem>>, %arg3: memref<1x8x32xf32, #tpu.memory_space<vmem>>, %arg4: memref<1x1x32xf32, #tpu.memory_space<vmem>>, %arg5: memref<1x1x32xf32, #tpu.memory_space<vmem>>, %arg6: memref<1x32x96xbf16, #tpu.memory_space<vmem>>, %arg7: memref<1x1x96xf32, #tpu.memory_space<vmem>>, %arg8: memref<1x32x32xbf16, #tpu.memory_space<vmem>>, %arg9: memref<1x1x32xf32, #tpu.memory_space<vmem>>, %arg10: memref<1x1x32xf32, #tpu.memory_space<vmem>>, %arg11: memref<1x1x32xf32, #tpu.memory_space<vmem>>, %arg12: memref<1x32x128xbf16, #tpu.memory_space<vmem>>, %arg13: memref<1x1x128xf32, #tpu.memory_space<vmem>>, %arg14: memref<1x128x32xbf16, #tpu.memory_space<vmem>>, %arg15: memref<1x1x32xf32, #tpu.memory_space<vmem>>, %arg16: memref<1x32xf32, #tpu.memory_space<vmem>>, %arg17: memref<1x32xf32, #tpu.memory_space<vmem>>, %arg18: memref<32x32xbf16, #tpu.memory_space<vmem>>, %arg19: memref<1x1x32xf32, #tpu.memory_space<vmem>>, %arg20: memref<8x32xf32, #tpu.memory_space<vmem>>, %arg21: memref<8x32xf32, #tpu.memory_space<vmem>>) attributes {dimension_semantics = [#tpu.dimension_semantics<parallel>, #tpu.dimension_semantics<arbitrary>], iteration_bounds = array<i64: 2, 2>, scalar_prefetch = 1 : i64, scratch_operands = 2 : i64, tpu.core_type = #tpu.core_type<tc>, window_params = [{transform_indices = @transform_0, window_bounds = array<i64: 1, 8, 32>}, {transform_indices = @transform_1, window_bounds = array<i64: 1, 1, 32>}, {transform_indices = @transform_2, window_bounds = array<i64: 1, 1, 32>}, {transform_indices = @transform_3, window_bounds = array<i64: 1, 32, 96>}, {transform_indices = @transform_4, window_bounds = array<i64: 1, 1, 96>}, {transform_indices = @transform_5, window_bounds = array<i64: 1, 32, 32>}, {transform_indices = @transform_6, window_bounds = array<i64: 1, 1, 32>}, {transform_indices = @transform_7, window_bounds = array<i64: 1, 1, 32>}, {transform_indices = @transform_8, window_bounds = array<i64: 1, 1, 32>}, {transform_indices = @transform_9, window_bounds = array<i64: 1, 32, 128>}, {transform_indices = @transform_10, window_bounds = array<i64: 1, 1, 128>}, {transform_indices = @transform_11, window_bounds = array<i64: 1, 128, 32>}, {transform_indices = @transform_12, window_bounds = array<i64: 1, 1, 32>}, {pipeline_mode = #tpu.pipeline_mode<synchronous>, transform_indices = @transform_13, window_bounds = array<i64: 1, 32>}, {pipeline_mode = #tpu.pipeline_mode<synchronous>, transform_indices = @transform_14, window_bounds = array<i64: 1, 32>}, {pipeline_mode = #tpu.pipeline_mode<synchronous>, transform_indices = @transform_15, window_bounds = array<i64: 32, 32>}, {transform_indices = @transform_16, window_bounds = array<i64: 1, 1, 32>}]} {
    %c0_i32 = arith.constant 0 : i32
    %0 = arith.cmpi eq, %arg1, %c0_i32 : i32
    %1 = arith.extui %0 : i1 to i32
    %c0_i32_0 = arith.constant 0 : i32
    %2 = arith.cmpi ne, %1, %c0_i32_0 : i32
    scf.if %2 {
      %c0_81 = arith.constant 0 : index
      %c0_82 = arith.constant 0 : index
      %c0_83 = arith.constant 0 : index
      %177 = vector.load %arg3[%c0_81, %c0_82, %c0_83] : memref<1x8x32xf32, #tpu.memory_space<vmem>>, vector<1x8x32xf32>
      %178 = vector.shape_cast %177 : vector<1x8x32xf32> to vector<8x32xf32>
      %c0_84 = arith.constant 0 : index
      %c0_85 = arith.constant 0 : index
      %179 = vector.load %arg20[%c0_84, %c0_85] : memref<8x32xf32, #tpu.memory_space<vmem>>, vector<8x32xf32>
      tpu.vector_store %arg20[%c0_84, %c0_85], %178 {strides = array<i32>} : memref<8x32xf32, #tpu.memory_space<vmem>>, vector<8x32xf32>,
    } else {
    }
    %c0 = arith.constant 0 : index
    %c0_1 = arith.constant 0 : index
    %3 = vector.load %arg20[%c0, %c0_1] : memref<8x32xf32, #tpu.memory_space<vmem>>, vector<8x32xf32>
    %c0_2 = arith.constant 0 : index
    %c0_3 = arith.constant 0 : index
    %c0_4 = arith.constant 0 : index
    %4 = vector.load %arg4[%c0_2, %c0_3, %c0_4] : memref<1x1x32xf32, #tpu.memory_space<vmem>>, vector<1x1x32xf32>
    %5 = vector.shape_cast %4 : vector<1x1x32xf32> to vector<1x32xf32>
    %c0_5 = arith.constant 0 : index
    %c0_6 = arith.constant 0 : index
    %c0_7 = arith.constant 0 : index
    %6 = vector.load %arg5[%c0_5, %c0_6, %c0_7] : memref<1x1x32xf32, #tpu.memory_space<vmem>>, vector<1x1x32xf32>
    %7 = vector.shape_cast %6 : vector<1x1x32xf32> to vector<1x32xf32>
    %cst = arith.constant dense<0.000000e+00> : vector<8xf32>
    %8 = vector.multi_reduction <add>, %3, %cst [1] : vector<8x32xf32> to vector<8xf32>
    %9 = vector.shape_cast %8 : vector<8xf32> to vector<8x1xf32>
    %cst_8 = arith.constant 3.200000e+01 : f32
    %10 = vector.broadcast %cst_8 : f32 to vector<8x1xf32>
    %11 = arith.divf %9, %10 : vector<8x1xf32>
    %12 = vector.broadcast %11 : vector<8x1xf32> to vector<8x32xf32>
    %13 = arith.subf %3, %12 : vector<8x32xf32>
    %14 = arith.mulf %13, %13 : vector<8x32xf32>
    %cst_9 = arith.constant dense<0.000000e+00> : vector<8xf32>
    %15 = vector.multi_reduction <add>, %14, %cst_9 [1] : vector<8x32xf32> to vector<8xf32>
    %16 = vector.shape_cast %15 : vector<8xf32> to vector<8x1xf32>
    %cst_10 = arith.constant 3.200000e+01 : f32
    %17 = vector.broadcast %cst_10 : f32 to vector<8x1xf32>
    %18 = arith.divf %16, %17 : vector<8x1xf32>
    %19 = vector.broadcast %11 : vector<8x1xf32> to vector<8x32xf32>
    %20 = arith.subf %3, %19 : vector<8x32xf32>
    %cst_11 = arith.constant 9.99999974E-6 : f32
    %21 = vector.broadcast %cst_11 : f32 to vector<8x1xf32>
    %22 = arith.addf %18, %21 : vector<8x1xf32>
    %23 = math.rsqrt %22 : vector<8x1xf32>
    %24 = vector.broadcast %23 : vector<8x1xf32> to vector<8x32xf32>
    %25 = arith.mulf %20, %24 : vector<8x32xf32>
    %26 = vector.broadcast %5 : vector<1x32xf32> to vector<8x32xf32>
    %27 = arith.mulf %25, %26 : vector<8x32xf32>
    %28 = vector.broadcast %7 : vector<1x32xf32> to vector<8x32xf32>
    %29 = arith.addf %27, %28 : vector<8x32xf32>
    %30 = arith.truncf %29 : vector<8x32xf32> to vector<8x32xbf16>
    %c0_12 = arith.constant 0 : index
    %c0_13 = arith.constant 0 : index
    %c0_14 = arith.constant 0 : index
    %31 = vector.load %arg6[%c0_12, %c0_13, %c0_14] : memref<1x32x96xbf16, #tpu.memory_space<vmem>>, vector<1x32x96xbf16>
    %32 = vector.shape_cast %31 : vector<1x32x96xbf16> to vector<32x96xbf16>
    %cst_15 = arith.constant dense<0.000000e+00> : vector<8x96xf32>
    %33 = tpu.matmul %30, %32, %cst_15 {dimension_numbers = #tpu.dot_dimension_numbers<[1], [0], [0], [1], [0, 0, 1, 1], [], []>} : vector<8x32xbf16>, vector<32x96xbf16>, vector<8x96xf32> -> vector<8x96xf32>
    %c0_16 = arith.constant 0 : index
    %c0_17 = arith.constant 0 : index
    %c0_18 = arith.constant 0 : index
    %34 = vector.load %arg7[%c0_16, %c0_17, %c0_18] : memref<1x1x96xf32, #tpu.memory_space<vmem>>, vector<1x1x96xf32>
    %35 = vector.shape_cast %34 : vector<1x1x96xf32> to vector<1x96xf32>
    %36 = vector.broadcast %35 : vector<1x96xf32> to vector<8x96xf32>
    %37 = arith.addf %33, %36 : vector<8x96xf32>
    %38 = tpu.iota {dimensions = array<i32: 0>} : vector<8x8xi32>
    %39 = tpu.iota {dimensions = array<i32: 1>} : vector<8x8xi32>
    %40 = arith.cmpi sle, %39, %38 : vector<8x8xi32>
    %cst_19 = arith.constant 0.000000e+00 : f32
    %cst_20 = arith.constant -1.000000e+09 : f32
    %41 = vector.broadcast %cst_19 : f32 to vector<8x8xf32>
    %42 = vector.broadcast %cst_20 : f32 to vector<8x8xf32>
    %43 = arith.select %40, %41, %42 : vector<8x8xi1>, vector<8x8xf32>
    %44 = vector.extract_strided_slice %37 {offsets = [0, 0], sizes = [8, 8], strides = [1, 1]} : vector<8x96xf32> to vector<8x8xf32>
    %45 = vector.extract_strided_slice %37 {offsets = [0, 32], sizes = [8, 8], strides = [1, 1]} : vector<8x96xf32> to vector<8x8xf32>
    %46 = vector.extract_strided_slice %37 {offsets = [0, 64], sizes = [8, 8], strides = [1, 1]} : vector<8x96xf32> to vector<8x8xf32>
    "tpu.trace_start"() <{level = 10 : i32, message = "qe,ke->qk"}> : () -> ()
    %cst_21 = arith.constant dense<0.000000e+00> : vector<8x8xf32>
    %47 = tpu.matmul %44, %45, %cst_21 {dimension_numbers = #tpu.dot_dimension_numbers<[1], [1], [0], [0], [0, 0, 1, 0], [], []>} : vector<8x8xf32>, vector<8x8xf32>, vector<8x8xf32> -> vector<8x8xf32>
    "tpu.trace_stop"() : () -> ()
    %48 = arith.addf %47, %43 : vector<8x8xf32>
    %cst_22 = arith.constant dense<0xFF800000> : vector<8xf32>
    %49 = vector.multi_reduction <maximumf>, %48, %cst_22 [1] : vector<8x8xf32> to vector<8xf32>
    %50 = vector.shape_cast %49 : vector<8xf32> to vector<8x1xf32>
    %51 = vector.broadcast %50 : vector<8x1xf32> to vector<8x8xf32>
    %52 = arith.subf %48, %51 : vector<8x8xf32>
    %53 = math.exp %52 : vector<8x8xf32>
    %cst_23 = arith.constant dense<0.000000e+00> : vector<8xf32>
    %54 = vector.multi_reduction <add>, %53, %cst_23 [1] : vector<8x8xf32> to vector<8xf32>
    %55 = vector.shape_cast %54 : vector<8xf32> to vector<8x1xf32>
    %56 = tpu.reciprocal %55 {approx = true} : vector<8x1xf32> -> vector<8x1xf32>
    %57 = vector.broadcast %56 : vector<8x1xf32> to vector<8x8xf32>
    %58 = arith.mulf %53, %57 : vector<8x8xf32>
    %cst_24 = arith.constant dense<0.000000e+00> : vector<8x8xf32>
    %59 = tpu.matmul %58, %46, %cst_24 {dimension_numbers = #tpu.dot_dimension_numbers<[1], [0], [0], [1], [0, 0, 1, 1], [], []>} : vector<8x8xf32>, vector<8x8xf32>, vector<8x8xf32> -> vector<8x8xf32>
    %c0_25 = arith.constant 0 : index
    %c0_26 = arith.constant 0 : index
    %60 = vector.load %arg21[%c0_25, %c0_26] : memref<8x32xf32, #tpu.memory_space<vmem>>, vector<8x8xf32>
    tpu.vector_store %arg21[%c0_25, %c0_26], %59 {strides = array<i32>} : memref<8x32xf32, #tpu.memory_space<vmem>>, vector<8x8xf32>,
    %61 = vector.extract_strided_slice %37 {offsets = [0, 8], sizes = [8, 8], strides = [1, 1]} : vector<8x96xf32> to vector<8x8xf32>
    %62 = vector.extract_strided_slice %37 {offsets = [0, 40], sizes = [8, 8], strides = [1, 1]} : vector<8x96xf32> to vector<8x8xf32>
    %63 = vector.extract_strided_slice %37 {offsets = [0, 72], sizes = [8, 8], strides = [1, 1]} : vector<8x96xf32> to vector<8x8xf32>
    "tpu.trace_start"() <{level = 10 : i32, message = "qe,ke->qk"}> : () -> ()
    %cst_27 = arith.constant dense<0.000000e+00> : vector<8x8xf32>
    %64 = tpu.matmul %61, %62, %cst_27 {dimension_numbers = #tpu.dot_dimension_numbers<[1], [1], [0], [0], [0, 0, 1, 0], [], []>} : vector<8x8xf32>, vector<8x8xf32>, vector<8x8xf32> -> vector<8x8xf32>
    "tpu.trace_stop"() : () -> ()
    %65 = arith.addf %64, %43 : vector<8x8xf32>
    %cst_28 = arith.constant dense<0xFF800000> : vector<8xf32>
    %66 = vector.multi_reduction <maximumf>, %65, %cst_28 [1] : vector<8x8xf32> to vector<8xf32>
    %67 = vector.shape_cast %66 : vector<8xf32> to vector<8x1xf32>
    %68 = vector.broadcast %67 : vector<8x1xf32> to vector<8x8xf32>
    %69 = arith.subf %65, %68 : vector<8x8xf32>
    %70 = math.exp %69 : vector<8x8xf32>
    %cst_29 = arith.constant dense<0.000000e+00> : vector<8xf32>
    %71 = vector.multi_reduction <add>, %70, %cst_29 [1] : vector<8x8xf32> to vector<8xf32>
    %72 = vector.shape_cast %71 : vector<8xf32> to vector<8x1xf32>
    %73 = tpu.reciprocal %72 {approx = true} : vector<8x1xf32> -> vector<8x1xf32>
    %74 = vector.broadcast %73 : vector<8x1xf32> to vector<8x8xf32>
    %75 = arith.mulf %70, %74 : vector<8x8xf32>
    %cst_30 = arith.constant dense<0.000000e+00> : vector<8x8xf32>
    %76 = tpu.matmul %75, %63, %cst_30 {dimension_numbers = #tpu.dot_dimension_numbers<[1], [0], [0], [1], [0, 0, 1, 1], [], []>} : vector<8x8xf32>, vector<8x8xf32>, vector<8x8xf32> -> vector<8x8xf32>
    %c0_31 = arith.constant 0 : index
    %c8 = arith.constant 8 : index
    %77 = vector.load %arg21[%c0_31, %c8] : memref<8x32xf32, #tpu.memory_space<vmem>>, vector<8x8xf32>
    tpu.vector_store %arg21[%c0_31, %c8], %76 {strides = array<i32>} : memref<8x32xf32, #tpu.memory_space<vmem>>, vector<8x8xf32>,
    %78 = vector.extract_strided_slice %37 {offsets = [0, 16], sizes = [8, 8], strides = [1, 1]} : vector<8x96xf32> to vector<8x8xf32>
    %79 = vector.extract_strided_slice %37 {offsets = [0, 48], sizes = [8, 8], strides = [1, 1]} : vector<8x96xf32> to vector<8x8xf32>
    %80 = vector.extract_strided_slice %37 {offsets = [0, 80], sizes = [8, 8], strides = [1, 1]} : vector<8x96xf32> to vector<8x8xf32>
    "tpu.trace_start"() <{level = 10 : i32, message = "qe,ke->qk"}> : () -> ()
    %cst_32 = arith.constant dense<0.000000e+00> : vector<8x8xf32>
    %81 = tpu.matmul %78, %79, %cst_32 {dimension_numbers = #tpu.dot_dimension_numbers<[1], [1], [0], [0], [0, 0, 1, 0], [], []>} : vector<8x8xf32>, vector<8x8xf32>, vector<8x8xf32> -> vector<8x8xf32>
    "tpu.trace_stop"() : () -> ()
    %82 = arith.addf %81, %43 : vector<8x8xf32>
    %cst_33 = arith.constant dense<0xFF800000> : vector<8xf32>
    %83 = vector.multi_reduction <maximumf>, %82, %cst_33 [1] : vector<8x8xf32> to vector<8xf32>
    %84 = vector.shape_cast %83 : vector<8xf32> to vector<8x1xf32>
    %85 = vector.broadcast %84 : vector<8x1xf32> to vector<8x8xf32>
    %86 = arith.subf %82, %85 : vector<8x8xf32>
    %87 = math.exp %86 : vector<8x8xf32>
    %cst_34 = arith.constant dense<0.000000e+00> : vector<8xf32>
    %88 = vector.multi_reduction <add>, %87, %cst_34 [1] : vector<8x8xf32> to vector<8xf32>
    %89 = vector.shape_cast %88 : vector<8xf32> to vector<8x1xf32>
    %90 = tpu.reciprocal %89 {approx = true} : vector<8x1xf32> -> vector<8x1xf32>
    %91 = vector.broadcast %90 : vector<8x1xf32> to vector<8x8xf32>
    %92 = arith.mulf %87, %91 : vector<8x8xf32>
    %cst_35 = arith.constant dense<0.000000e+00> : vector<8x8xf32>
    %93 = tpu.matmul %92, %80, %cst_35 {dimension_numbers = #tpu.dot_dimension_numbers<[1], [0], [0], [1], [0, 0, 1, 1], [], []>} : vector<8x8xf32>, vector<8x8xf32>, vector<8x8xf32> -> vector<8x8xf32>
    %c0_36 = arith.constant 0 : index
    %c16 = arith.constant 16 : index
    %94 = vector.load %arg21[%c0_36, %c16] : memref<8x32xf32, #tpu.memory_space<vmem>>, vector<8x8xf32>
    tpu.vector_store %arg21[%c0_36, %c16], %93 {strides = array<i32>} : memref<8x32xf32, #tpu.memory_space<vmem>>, vector<8x8xf32>,
    %95 = vector.extract_strided_slice %37 {offsets = [0, 24], sizes = [8, 8], strides = [1, 1]} : vector<8x96xf32> to vector<8x8xf32>
    %96 = vector.extract_strided_slice %37 {offsets = [0, 56], sizes = [8, 8], strides = [1, 1]} : vector<8x96xf32> to vector<8x8xf32>
    %97 = vector.extract_strided_slice %37 {offsets = [0, 88], sizes = [8, 8], strides = [1, 1]} : vector<8x96xf32> to vector<8x8xf32>
    "tpu.trace_start"() <{level = 10 : i32, message = "qe,ke->qk"}> : () -> ()
    %cst_37 = arith.constant dense<0.000000e+00> : vector<8x8xf32>
    %98 = tpu.matmul %95, %96, %cst_37 {dimension_numbers = #tpu.dot_dimension_numbers<[1], [1], [0], [0], [0, 0, 1, 0], [], []>} : vector<8x8xf32>, vector<8x8xf32>, vector<8x8xf32> -> vector<8x8xf32>
    "tpu.trace_stop"() : () -> ()
    %99 = arith.addf %98, %43 : vector<8x8xf32>
    %cst_38 = arith.constant dense<0xFF800000> : vector<8xf32>
    %100 = vector.multi_reduction <maximumf>, %99, %cst_38 [1] : vector<8x8xf32> to vector<8xf32>
    %101 = vector.shape_cast %100 : vector<8xf32> to vector<8x1xf32>
    %102 = vector.broadcast %101 : vector<8x1xf32> to vector<8x8xf32>
    %103 = arith.subf %99, %102 : vector<8x8xf32>
    %104 = math.exp %103 : vector<8x8xf32>
    %cst_39 = arith.constant dense<0.000000e+00> : vector<8xf32>
    %105 = vector.multi_reduction <add>, %104, %cst_39 [1] : vector<8x8xf32> to vector<8xf32>
    %106 = vector.shape_cast %105 : vector<8xf32> to vector<8x1xf32>
    %107 = tpu.reciprocal %106 {approx = true} : vector<8x1xf32> -> vector<8x1xf32>
    %108 = vector.broadcast %107 : vector<8x1xf32> to vector<8x8xf32>
    %109 = arith.mulf %104, %108 : vector<8x8xf32>
    %cst_40 = arith.constant dense<0.000000e+00> : vector<8x8xf32>
    %110 = tpu.matmul %109, %97, %cst_40 {dimension_numbers = #tpu.dot_dimension_numbers<[1], [0], [0], [1], [0, 0, 1, 1], [], []>} : vector<8x8xf32>, vector<8x8xf32>, vector<8x8xf32> -> vector<8x8xf32>
    %c0_41 = arith.constant 0 : index
    %c24 = arith.constant 24 : index
    %111 = vector.load %arg21[%c0_41, %c24] : memref<8x32xf32, #tpu.memory_space<vmem>>, vector<8x8xf32>
    tpu.vector_store %arg21[%c0_41, %c24], %110 {strides = array<i32>} : memref<8x32xf32, #tpu.memory_space<vmem>>, vector<8x8xf32>,
    %c0_42 = arith.constant 0 : index
    %c0_43 = arith.constant 0 : index
    %112 = vector.load %arg21[%c0_42, %c0_43] : memref<8x32xf32, #tpu.memory_space<vmem>>, vector<8x32xf32>
    %113 = arith.truncf %112 : vector<8x32xf32> to vector<8x32xbf16>
    %c0_44 = arith.constant 0 : index
    %c0_45 = arith.constant 0 : index
    %c0_46 = arith.constant 0 : index
    %114 = vector.load %arg8[%c0_44, %c0_45, %c0_46] : memref<1x32x32xbf16, #tpu.memory_space<vmem>>, vector<1x32x32xbf16>
    %115 = vector.shape_cast %114 : vector<1x32x32xbf16> to vector<32x32xbf16>
    %cst_47 = arith.constant dense<0.000000e+00> : vector<8x32xf32>
    %116 = tpu.matmul %113, %115, %cst_47 {dimension_numbers = #tpu.dot_dimension_numbers<[1], [0], [0], [1], [0, 0, 1, 1], [], []>} : vector<8x32xbf16>, vector<32x32xbf16>, vector<8x32xf32> -> vector<8x32xf32>
    %c0_48 = arith.constant 0 : index
    %c0_49 = arith.constant 0 : index
    %c0_50 = arith.constant 0 : index
    %117 = vector.load %arg9[%c0_48, %c0_49, %c0_50] : memref<1x1x32xf32, #tpu.memory_space<vmem>>, vector<1x1x32xf32>
    %118 = vector.shape_cast %117 : vector<1x1x32xf32> to vector<1x32xf32>
    %119 = vector.broadcast %118 : vector<1x32xf32> to vector<8x32xf32>
    %120 = arith.addf %116, %119 : vector<8x32xf32>
    %121 = arith.addf %3, %120 : vector<8x32xf32>
    %c0_51 = arith.constant 0 : index
    %c0_52 = arith.constant 0 : index
    %c0_53 = arith.constant 0 : index
    %122 = vector.load %arg10[%c0_51, %c0_52, %c0_53] : memref<1x1x32xf32, #tpu.memory_space<vmem>>, vector<1x1x32xf32>
    %123 = vector.shape_cast %122 : vector<1x1x32xf32> to vector<1x32xf32>
    %c0_54 = arith.constant 0 : index
    %c0_55 = arith.constant 0 : index
    %c0_56 = arith.constant 0 : index
    %124 = vector.load %arg11[%c0_54, %c0_55, %c0_56] : memref<1x1x32xf32, #tpu.memory_space<vmem>>, vector<1x1x32xf32>
    %125 = vector.shape_cast %124 : vector<1x1x32xf32> to vector<1x32xf32>
    %cst_57 = arith.constant dense<0.000000e+00> : vector<8xf32>
    %126 = vector.multi_reduction <add>, %121, %cst_57 [1] : vector<8x32xf32> to vector<8xf32>
    %127 = vector.shape_cast %126 : vector<8xf32> to vector<8x1xf32>
    %cst_58 = arith.constant 3.200000e+01 : f32
    %128 = vector.broadcast %cst_58 : f32 to vector<8x1xf32>
    %129 = arith.divf %127, %128 : vector<8x1xf32>
    %130 = vector.broadcast %129 : vector<8x1xf32> to vector<8x32xf32>
    %131 = arith.subf %121, %130 : vector<8x32xf32>
    %132 = arith.mulf %131, %131 : vector<8x32xf32>
    %cst_59 = arith.constant dense<0.000000e+00> : vector<8xf32>
    %133 = vector.multi_reduction <add>, %132, %cst_59 [1] : vector<8x32xf32> to vector<8xf32>
    %134 = vector.shape_cast %133 : vector<8xf32> to vector<8x1xf32>
    %cst_60 = arith.constant 3.200000e+01 : f32
    %135 = vector.broadcast %cst_60 : f32 to vector<8x1xf32>
    %136 = arith.divf %134, %135 : vector<8x1xf32>
    %137 = vector.broadcast %129 : vector<8x1xf32> to vector<8x32xf32>
    %138 = arith.subf %121, %137 : vector<8x32xf32>
    %cst_61 = arith.constant 9.99999974E-6 : f32
    %139 = vector.broadcast %cst_61 : f32 to vector<8x1xf32>
    %140 = arith.addf %136, %139 : vector<8x1xf32>
    %141 = math.rsqrt %140 : vector<8x1xf32>
    %142 = vector.broadcast %141 : vector<8x1xf32> to vector<8x32xf32>
    %143 = arith.mulf %138, %142 : vector<8x32xf32>
    %144 = vector.broadcast %123 : vector<1x32xf32> to vector<8x32xf32>
    %145 = arith.mulf %143, %144 : vector<8x32xf32>
    %146 = vector.broadcast %125 : vector<1x32xf32> to vector<8x32xf32>
    %147 = arith.addf %145, %146 : vector<8x32xf32>
    %148 = arith.truncf %147 : vector<8x32xf32> to vector<8x32xbf16>
    %c0_62 = arith.constant 0 : index
    %c0_63 = arith.constant 0 : index
    %c0_64 = arith.constant 0 : index
    %149 = vector.load %arg12[%c0_62, %c0_63, %c0_64] : memref<1x32x128xbf16, #tpu.memory_space<vmem>>, vector<1x32x128xbf16>
    %150 = vector.shape_cast %149 : vector<1x32x128xbf16> to vector<32x128xbf16>
    %cst_65 = arith.constant dense<0.000000e+00> : vector<8x128xf32>
    %151 = tpu.matmul %148, %150, %cst_65 {dimension_numbers = #tpu.dot_dimension_numbers<[1], [0], [0], [1], [0, 0, 1, 1], [], []>} : vector<8x32xbf16>, vector<32x128xbf16>, vector<8x128xf32> -> vector<8x128xf32>
    %c0_66 = arith.constant 0 : index
    %c0_67 = arith.constant 0 : index
    %c0_68 = arith.constant 0 : index
    %152 = vector.load %arg13[%c0_66, %c0_67, %c0_68] : memref<1x1x128xf32, #tpu.memory_space<vmem>>, vector<1x1x128xf32>
    %153 = vector.shape_cast %152 : vector<1x1x128xf32> to vector<1x128xf32>
    %154 = vector.broadcast %153 : vector<1x128xf32> to vector<8x128xf32>
    %155 = arith.addf %151, %154 : vector<8x128xf32>
    %cst_69 = arith.constant 1.702000e+00 : f32
    %156 = vector.broadcast %cst_69 : f32 to vector<8x128xf32>
    %157 = arith.mulf %156, %155 : vector<8x128xf32>
    %158 = arith.negf %157 : vector<8x128xf32>
    %159 = math.exp %158 : vector<8x128xf32>
    %cst_70 = arith.constant 1.000000e+00 : f32
    %160 = vector.broadcast %cst_70 : f32 to vector<8x128xf32>
    %161 = arith.addf %160, %159 : vector<8x128xf32>
    %162 = arith.divf %160, %161 : vector<8x128xf32>
    %163 = arith.mulf %155, %162 : vector<8x128xf32>
    %164 = arith.truncf %163 : vector<8x128xf32> to vector<8x128xbf16>
    %c0_71 = arith.constant 0 : index
    %c0_72 = arith.constant 0 : index
    %c0_73 = arith.constant 0 : index
    %165 = vector.load %arg14[%c0_71, %c0_72, %c0_73] : memref<1x128x32xbf16, #tpu.memory_space<vmem>>, vector<1x128x32xbf16>
    %166 = vector.shape_cast %165 : vector<1x128x32xbf16> to vector<128x32xbf16>
    %cst_74 = arith.constant dense<0.000000e+00> : vector<8x32xf32>
    %167 = tpu.matmul %164, %166, %cst_74 {dimension_numbers = #tpu.dot_dimension_numbers<[1], [0], [0], [1], [0, 0, 1, 1], [], []>} : vector<8x128xbf16>, vector<128x32xbf16>, vector<8x32xf32> -> vector<8x32xf32>
    %c0_75 = arith.constant 0 : index
    %c0_76 = arith.constant 0 : index
    %c0_77 = arith.constant 0 : index
    %168 = vector.load %arg15[%c0_75, %c0_76, %c0_77] : memref<1x1x32xf32, #tpu.memory_space<vmem>>, vector<1x1x32xf32>
    %169 = vector.shape_cast %168 : vector<1x1x32xf32> to vector<1x32xf32>
    %170 = vector.broadcast %169 : vector<1x32xf32> to vector<8x32xf32>
    %171 = arith.addf %167, %170 : vector<8x32xf32>
    %172 = arith.addf %121, %171 : vector<8x32xf32>
    %c0_78 = arith.constant 0 : index
    %c0_79 = arith.constant 0 : index
    %173 = vector.load %arg20[%c0_78, %c0_79] : memref<8x32xf32, #tpu.memory_space<vmem>>, vector<8x32xf32>
    tpu.vector_store %arg20[%c0_78, %c0_79], %172 {strides = array<i32>} : memref<8x32xf32, #tpu.memory_space<vmem>>, vector<8x32xf32>,
    %c1_i32 = arith.constant 1 : i32
    %174 = arith.cmpi eq, %arg1, %c1_i32 : i32
    %175 = arith.extui %174 : i1 to i32
    %c0_i32_80 = arith.constant 0 : i32
    %176 = arith.cmpi ne, %175, %c0_i32_80 : i32
    scf.if %176 {
      %177 = arith.index_cast %arg0 : i32 to index
      %178 = memref.load %arg2[%177] : memref<2xi32, #tpu.memory_space<smem>>
      %179 = arith.index_cast %178 : i32 to index
      %c0_81 = arith.constant 0 : index
      %180 = vector.load %arg20[%179, %c0_81] : memref<8x32xf32, #tpu.memory_space<vmem>>, vector<1x32xf32>
      %c0_82 = arith.constant 0 : index
      %c0_83 = arith.constant 0 : index
      %181 = vector.load %arg16[%c0_82, %c0_83] : memref<1x32xf32, #tpu.memory_space<vmem>>, vector<1x32xf32>
      %c0_84 = arith.constant 0 : index
      %c0_85 = arith.constant 0 : index
      %182 = vector.load %arg17[%c0_84, %c0_85] : memref<1x32xf32, #tpu.memory_space<vmem>>, vector<1x32xf32>
      %cst_86 = arith.constant dense<0.000000e+00> : vector<1xf32>
      %183 = vector.multi_reduction <add>, %180, %cst_86 [1] : vector<1x32xf32> to vector<1xf32>
      %184 = vector.shape_cast %183 : vector<1xf32> to vector<1x1xf32>
      %cst_87 = arith.constant 3.200000e+01 : f32
      %185 = vector.broadcast %cst_87 : f32 to vector<1x1xf32>
      %186 = arith.divf %184, %185 : vector<1x1xf32>
      %187 = vector.broadcast %186 : vector<1x1xf32> to vector<1x32xf32>
      %188 = arith.subf %180, %187 : vector<1x32xf32>
      %189 = arith.mulf %188, %188 : vector<1x32xf32>
      %cst_88 = arith.constant dense<0.000000e+00> : vector<1xf32>
      %190 = vector.multi_reduction <add>, %189, %cst_88 [1] : vector<1x32xf32> to vector<1xf32>
      %191 = vector.shape_cast %190 : vector<1xf32> to vector<1x1xf32>
      %cst_89 = arith.constant 3.200000e+01 : f32
      %192 = vector.broadcast %cst_89 : f32 to vector<1x1xf32>
      %193 = arith.divf %191, %192 : vector<1x1xf32>
      %194 = vector.broadcast %186 : vector<1x1xf32> to vector<1x32xf32>
      %195 = arith.subf %180, %194 : vector<1x32xf32>
      %cst_90 = arith.constant 9.99999974E-6 : f32
      %196 = vector.broadcast %cst_90 : f32 to vector<1x1xf32>
      %197 = arith.addf %193, %196 : vector<1x1xf32>
      %198 = math.rsqrt %197 : vector<1x1xf32>
      %199 = vector.broadcast %198 : vector<1x1xf32> to vector<1x32xf32>
      %200 = arith.mulf %195, %199 : vector<1x32xf32>
      %201 = arith.mulf %200, %181 : vector<1x32xf32>
      %202 = arith.addf %201, %182 : vector<1x32xf32>
      %203 = arith.truncf %202 : vector<1x32xf32> to vector<1x32xbf16>
      %c0_91 = arith.constant 0 : index
      %c0_92 = arith.constant 0 : index
      %204 = vector.load %arg18[%c0_91, %c0_92] : memref<32x32xbf16, #tpu.memory_space<vmem>>, vector<32x32xbf16>
      %cst_93 = arith.constant dense<0.000000e+00> : vector<1x32xf32>
      %205 = tpu.matmul %203, %204, %cst_93 {dimension_numbers = #tpu.dot_dimension_numbers<[1], [0], [0], [1], [0, 0, 1, 1], [], []>} : vector<1x32xbf16>, vector<32x32xbf16>, vector<1x32xf32> -> vector<1x32xf32>
      %c0_94 = arith.constant 0 : index
      %c0_95 = arith.constant 0 : index
      %c0_96 = arith.constant 0 : index
      %206 = vector.load %arg19[%c0_94, %c0_95, %c0_96] : memref<1x1x32xf32, #tpu.memory_space<vmem>>, vector<1x1x32xf32>
      %207 = vector.shape_cast %206 : vector<1x1x32xf32> to vector<1x32xf32>
      %208 = vector.shape_cast %205 : vector<1x32xf32> to vector<1x1x32xf32>
      tpu.vector_store %arg19[%c0_94, %c0_95, %c0_96], %208 {strides = array<i32>} : memref<1x1x32xf32, #tpu.memory_space<vmem>>, vector<1x1x32xf32>,
    } else {
    }
    return
  }
  func.func @transform_0(%arg0: i32, %arg1: i32, %arg2: memref<2xi32, #tpu.memory_space<smem>>) -> (i32, i32, i32) {
    %c0_i32 = arith.constant 0 : i32
    %c0_i32_0 = arith.constant 0 : i32
    %c0_i32_1 = arith.constant 0 : i32
    return %arg0, %c0_i32, %c0_i32_0 : i32, i32, i32
  }
  func.func @transform_1(%arg0: i32, %arg1: i32, %arg2: memref<2xi32, #tpu.memory_space<smem>>) -> (i32, i32, i32) {
    %c0_i32 = arith.constant 0 : i32
    %c0_i32_0 = arith.constant 0 : i32
    %c0_i32_1 = arith.constant 0 : i32
    return %arg1, %c0_i32, %c0_i32_0 : i32, i32, i32
  }
  func.func @transform_2(%arg0: i32, %arg1: i32, %arg2: memref<2xi32, #tpu.memory_space<smem>>) -> (i32, i32, i32) {
    %c0_i32 = arith.constant 0 : i32
    %c0_i32_0 = arith.constant 0 : i32
    %c0_i32_1 = arith.constant 0 : i32
    return %arg1, %c0_i32, %c0_i32_0 : i32, i32, i32
  }
  func.func @transform_3(%arg0: i32, %arg1: i32, %arg2: memref<2xi32, #tpu.memory_space<smem>>) -> (i32, i32, i32) {
    %c0_i32 = arith.constant 0 : i32
    %c0_i32_0 = arith.constant 0 : i32
    %c0_i32_1 = arith.constant 0 : i32
    return %arg1, %c0_i32, %c0_i32_0 : i32, i32, i32
  }
  func.func @transform_4(%arg0: i32, %arg1: i32, %arg2: memref<2xi32, #tpu.memory_space<smem>>) -> (i32, i32, i32) {
    %c0_i32 = arith.constant 0 : i32
    %c0_i32_0 = arith.constant 0 : i32
    %c0_i32_1 = arith.constant 0 : i32
    return %arg1, %c0_i32, %c0_i32_0 : i32, i32, i32
  }
  func.func @transform_5(%arg0: i32, %arg1: i32, %arg2: memref<2xi32, #tpu.memory_space<smem>>) -> (i32, i32, i32) {
    %c0_i32 = arith.constant 0 : i32
    %c0_i32_0 = arith.constant 0 : i32
    %c0_i32_1 = arith.constant 0 : i32
    return %arg1, %c0_i32, %c0_i32_0 : i32, i32, i32
  }
  func.func @transform_6(%arg0: i32, %arg1: i32, %arg2: memref<2xi32, #tpu.memory_space<smem>>) -> (i32, i32, i32) {
    %c0_i32 = arith.constant 0 : i32
    %c0_i32_0 = arith.constant 0 : i32
    %c0_i32_1 = arith.constant 0 : i32
    return %arg1, %c0_i32, %c0_i32_0 : i32, i32, i32
  }
  func.func @transform_7(%arg0: i32, %arg1: i32, %arg2: memref<2xi32, #tpu.memory_space<smem>>) -> (i32, i32, i32) {
    %c0_i32 = arith.constant 0 : i32
    %c0_i32_0 = arith.constant 0 : i32
    %c0_i32_1 = arith.constant 0 : i32
    return %arg1, %c0_i32, %c0_i32_0 : i32, i32, i32
  }
  func.func @transform_8(%arg0: i32, %arg1: i32, %arg2: memref<2xi32, #tpu.memory_space<smem>>) -> (i32, i32, i32) {
    %c0_i32 = arith.constant 0 : i32
    %c0_i32_0 = arith.constant 0 : i32
    %c0_i32_1 = arith.constant 0 : i32
    return %arg1, %c0_i32, %c0_i32_0 : i32, i32, i32
  }
  func.func @transform_9(%arg0: i32, %arg1: i32, %arg2: memref<2xi32, #tpu.memory_space<smem>>) -> (i32, i32, i32) {
    %c0_i32 = arith.constant 0 : i32
    %c0_i32_0 = arith.constant 0 : i32
    %c0_i32_1 = arith.constant 0 : i32
    return %arg1, %c0_i32, %c0_i32_0 : i32, i32, i32
  }
  func.func @transform_10(%arg0: i32, %arg1: i32, %arg2: memref<2xi32, #tpu.memory_space<smem>>) -> (i32, i32, i32) {
    %c0_i32 = arith.constant 0 : i32
    %c0_i32_0 = arith.constant 0 : i32
    %c0_i32_1 = arith.constant 0 : i32
    return %arg1, %c0_i32, %c0_i32_0 : i32, i32, i32
  }
  func.func @transform_11(%arg0: i32, %arg1: i32, %arg2: memref<2xi32, #tpu.memory_space<smem>>) -> (i32, i32, i32) {
    %c0_i32 = arith.constant 0 : i32
    %c0_i32_0 = arith.constant 0 : i32
    %c0_i32_1 = arith.constant 0 : i32
    return %arg1, %c0_i32, %c0_i32_0 : i32, i32, i32
  }
  func.func @transform_12(%arg0: i32, %arg1: i32, %arg2: memref<2xi32, #tpu.memory_space<smem>>) -> (i32, i32, i32) {
    %c0_i32 = arith.constant 0 : i32
    %c0_i32_0 = arith.constant 0 : i32
    %c0_i32_1 = arith.constant 0 : i32
    return %arg1, %c0_i32, %c0_i32_0 : i32, i32, i32
  }
  func.func @transform_13(%arg0: i32, %arg1: i32, %arg2: memref<2xi32, #tpu.memory_space<smem>>) -> (i32, i32) {
    %c0_i32 = arith.constant 0 : i32
    %c0_i32_0 = arith.constant 0 : i32
    %c0_i32_1 = arith.constant 0 : i32
    return %c0_i32, %c0_i32_0 : i32, i32
  }
  func.func @transform_14(%arg0: i32, %arg1: i32, %arg2: memref<2xi32, #tpu.memory_space<smem>>) -> (i32, i32) {
    %c0_i32 = arith.constant 0 : i32
    %c0_i32_0 = arith.constant 0 : i32
    %c0_i32_1 = arith.constant 0 : i32
    return %c0_i32, %c0_i32_0 : i32, i32
  }
  func.func @transform_15(%arg0: i32, %arg1: i32, %arg2: memref<2xi32, #tpu.memory_space<smem>>) -> (i32, i32) {
    %c0_i32 = arith.constant 0 : i32
    %c0_i32_0 = arith.constant 0 : i32
    %c0_i32_1 = arith.constant 0 : i32
    return %c0_i32, %c0_i32_0 : i32, i32
  }
  func.func @transform_16(%arg0: i32, %arg1: i32, %arg2: memref<2xi32, #tpu.memory_space<smem>>) -> (i32, i32, i32) {
    %c0_i32 = arith.constant 0 : i32
    %c0_i32_0 = arith.constant 0 : i32
    %c0_i32_1 = arith.constant 0 : i32
    return %arg0, %c0_i32, %c0_i32_0 : i32, i32, i32
  }
}

</mosaic_0001>

<llo_original>
// kernel: clip_text_features.1
$region0: #{clip_text_features.1}
  #allocation0 [shape = 'u32[]', space=smem, size = 0x4, offset = 0x4, fixed_abs, tag = 'smem constant byte address 0x4 - core index']
  #allocation1 [shape = 'u32[144,128]{1,0:T(1,128)}', space=vmem, size = 0x12000, scoped, tag = 'internal scratch']
  #allocation2 [shape = 'f32[8,32]{1,0:T(8,128)}', space=vmem, size = 0x1000, scoped, tag = 'scratch operand']
  #allocation3 [shape = 'f32[8,32]{1,0:T(8,128)}', space=vmem, size = 0x1000, scoped, tag = 'scratch operand']
  #allocation4 [shape = 's32[1]{0}', space=sflag, size = 0x4, scoped, tag = 'scoped memory for clip_text_features.1']
  #allocation5 [shape = 'u8[512]{0}', space=smem, size = 0x200, scoped, tag = 'prefetched SMEM operand 0']
  %s0 = inlined_call_operand.vmem [shape: s32[2], index: 0, kind: input, shape index: {}]
  %s1 = inlined_call_operand.vmem [shape: f32[2,8,32], index: 1, kind: input, shape index: {}]
  %s2 = inlined_call_operand.vmem [shape: f32[2,1,32], index: 2, kind: input, shape index: {}]
  %s3 = inlined_call_operand.vmem [shape: f32[2,1,32], index: 3, kind: input, shape index: {}]
  %s4 = inlined_call_operand.vmem [shape: bf16[2,32,96], index: 4, kind: input, shape index: {}]
  %s5 = inlined_call_operand.vmem [shape: f32[2,1,96], index: 5, kind: input, shape index: {}]
  %s6 = inlined_call_operand.vmem [shape: bf16[2,32,32], index: 6, kind: input, shape index: {}]
  %s7 = inlined_call_operand.vmem [shape: f32[2,1,32], index: 7, kind: input, shape index: {}]
  %s8 = inlined_call_operand.vmem [shape: f32[2,1,32], index: 8, kind: input, shape index: {}]
  %s9 = inlined_call_operand.vmem [shape: f32[2,1,32], index: 9, kind: input, shape index: {}]
  %s10 = inlined_call_operand.vmem [shape: bf16[2,32,128], index: 10, kind: input, shape index: {}]
  %s11 = inlined_call_operand.vmem [shape: f32[2,1,128], index: 11, kind: input, shape index: {}]
  %s12 = inlined_call_operand.vmem [shape: bf16[2,128,32], index: 12, kind: input, shape index: {}]
  %s13 = inlined_call_operand.vmem [shape: f32[2,1,32], index: 13, kind: input, shape index: {}]
  %s14 = inlined_call_operand.vmem [shape: f32[1,32], index: 14, kind: input, shape index: {}]
  %s15 = inlined_call_operand.vmem [shape: f32[1,32], index: 15, kind: input, shape index: {}]
  %s16 = inlined_call_operand.vmem [shape: bf16[32,32], index: 16, kind: input, shape index: {}]
  %s17 = inlined_call_operand.hbm [shape: f32[2,1,32], index: 17, kind: output, shape index: {}]
  %s18 = sld [smem:[#allocation0]]
  $region105: #{clip_text_features.1} parent=0
    _
  %s20 = ssub.s32 1, %s18
  %s21 = scalar_select 0, %s20, %s18
  %s22 = sshll.u32 %s0, 4
  %s23 = int_to_ptr.vmem [resolvable:$true] %s22
  %25 = dma.vmem_to_smem %s23, 16, [#allocation5], [#allocation4]
  %26 = dma.done [#allocation4], 16
  %27 = sfence
  $region1: #{clip_text_features.1} parent=0
    #allocation6 [shape = 'u8[1024]{0}', space=vmem, size = 0x400, scoped, tag = 'output window, operand 0']
    #allocation7 [shape = 's32[2]{0}', space=sflag, size = 0x8, scoped, tag = 'scoped memory for clip_text_features.1']
    %28 = vsyncpa [#allocation7], 0
    %s29 = scalar_lea.sflag [#allocation7], 1
    %30 = vsyncpa %s29, 0
    loop: start=0, step=1, limit=6
    $region2: #{clip_text_features.1} parent=1 // loop_pre_header
      _
    $region3: #{clip_text_features.1} parent=1 // loop_header
      %s32 = sphi 0, %s36
      %p33 = scmp.ge.s32.totalorder %s32, 6
      %s39 = sphi 0, %s51
      %s40 = sphi 0, %s47
      %s41 = sphi 0, %s39
      %s42 = sphi 0, %s40
      %s43 = sphi 0, %s41
      %s44 = sphi 0, %s42
      %s54 = sphi 0, %s56
      %s57 = sphi 0, %s54
      %s58 = sphi 0, %s57
      %s74 = sphi 0, %s58
      %s80 = sphi 0, %s82
      %s83 = sphi 0, %s80
      %s84 = sphi 0, %s83
      %s100 = sphi 0, %s84
      %s106 = sphi 0, %s108
      %s109 = sphi 0, %s106
      %s110 = sphi 0, %s109
      %s126 = sphi 0, %s110
      %s132 = sphi 0, %s134
      %s135 = sphi 0, %s132
      %s136 = sphi 0, %s135
      %s152 = sphi 0, %s136
      %s158 = sphi 0, %s160
      %s161 = sphi 0, %s158
      %s162 = sphi 0, %s161
      %s178 = sphi 0, %s162
      %s184 = sphi 0, %s186
      %s187 = sphi 0, %s184
      %s188 = sphi 0, %s187
      %s204 = sphi 0, %s188
      %s210 = sphi 0, %s212
      %s213 = sphi 0, %s210
      %s214 = sphi 0, %s213
      %s230 = sphi 0, %s214
      %s236 = sphi 0, %s238
      %s239 = sphi 0, %s236
      %s240 = sphi 0, %s239
      %s256 = sphi 0, %s240
      %s262 = sphi 0, %s264
      %s265 = sphi 0, %s262
      %s266 = sphi 0, %s265
      %s282 = sphi 0, %s266
      %s288 = sphi 0, %s290
      %s291 = sphi 0, %s288
      %s292 = sphi 0, %s291
      %s308 = sphi 0, %s292
      %s314 = sphi 0, %s316
      %s317 = sphi 0, %s314
      %s318 = sphi 0, %s317
      %s334 = sphi 0, %s318
      %s340 = sphi 0, %s342
      %s343 = sphi 0, %s340
      %s344 = sphi 0, %s343
      %s360 = sphi 0, %s344
      %s366 = sphi 0, %s368
      %s369 = sphi 0, %s366
      %s370 = sphi 0, %s369
      %s386 = sphi 0, %s370
      %s390 = sphi 0, %s390
      %s392 = sphi 0, %s390
      %s393 = sphi 0, %s392
      %s407 = sphi 0, %s393
      %s411 = sphi 0, %s411
      %s413 = sphi 0, %s411
      %s414 = sphi 0, %s413
      %s428 = sphi 0, %s414
      %s432 = sphi 0, %s432
      %s434 = sphi 0, %s432
      %s435 = sphi 0, %s434
      %s449 = sphi 0, %s435
      %s455 = sphi 0, %s457
      %s458 = sphi 0, %s455
      %s459 = sphi 0, %s458
      %s475 = sphi 0, %s459
    $region4: #{clip_text_features.1} parent=1 // loop_header_branch
      %35 = sbr.rel (%p33) target = $region8
    $region5: #{clip_text_features.1} parent=1 // loop_body
      %s37 = ssub.s32 %s32, 1
      %s38 = ssub.s32 %s32, 2
      %s45 = sadd.s32 1, %s40
      %p46 = scmp.ge.s32.totalorder %s45, 2
      %s47 = scalar_select %p46, 0, %s45
      %s48 = sadd.s32 1, %s39
      %s49 = scalar_select %p46, %s48, %s39
      %p50 = scmp.ge.s32.totalorder %s49, 2
      %s51 = scalar_select %p50, 0, %s49
      %s52 = ssub.s32 %s39, %s51
      %p53 = scmp.eq.s32.totalorder %s52, 0
      %s55 = sadd.s32 %s54, 1
      %s56 = scalar_select %p53, %s54, %s55
      %p59 = pneg %p53
      %p60 = scmp.eq.s32.totalorder %s32, 3
      %p61 = por %p59, %p60
      %p62 = scmp.ne.s32.totalorder %s54, %s57
      %p63 = scmp.eq.s32.totalorder %s32, 0
      %p64 = por %p62, %p63
      %p65 = scmp.ne.s32.totalorder %s54, %s57
      %p66 = scmp.eq.s32.totalorder %s37, 3
      %p67 = por %p65, %p66
      %p68 = scmp.ne.s32.totalorder %s57, %s58
      %p69 = scmp.eq.s32.totalorder %s37, 0
      %p70 = por %p68, %p69
      %p71 = scmp.ne.s32.totalorder %s57, %s58
      %p72 = scmp.eq.s32.totalorder %s38, 3
      %p73 = por %p71, %p72
      %p75 = scmp.ne.s32.totalorder %s58, %s74
      %p76 = scmp.eq.s32.totalorder %s38, 0
      %p77 = por %p75, %p76
      %s78 = ssub.s32 %s40, %s47
      %p79 = scmp.eq.s32.totalorder %s78, 0
      %s81 = sadd.s32 %s80, 1
      %s82 = scalar_select %p79, %s80, %s81
      %p85 = pneg %p79
      %p86 = scmp.eq.s32.totalorder %s32, 3
      %p87 = por %p85, %p86
      %p88 = scmp.ne.s32.totalorder %s80, %s83
      %p89 = scmp.eq.s32.totalorder %s32, 0
      %p90 = por %p88, %p89
      %p91 = scmp.ne.s32.totalorder %s80, %s83
      %p92 = scmp.eq.s32.totalorder %s37, 3
      %p93 = por %p91, %p92
      %p94 = scmp.ne.s32.totalorder %s83, %s84
      %p95 = scmp.eq.s32.totalorder %s37, 0
      %p96 = por %p94, %p95
      %p97 = scmp.ne.s32.totalorder %s83, %s84
      %p98 = scmp.eq.s32.totalorder %s38, 3
      %p99 = por %p97, %p98
      %p101 = scmp.ne.s32.totalorder %s84, %s100
      %p102 = scmp.eq.s32.totalorder %s38, 0
      %p103 = por %p101, %p102
      %s104 = ssub.s32 %s40, %s47
      %p105 = scmp.eq.s32.totalorder %s104, 0
      %s107 = sadd.s32 %s106, 1
      %s108 = scalar_select %p105, %s106, %s107
      %p111 = pneg %p105
      %p112 = scmp.eq.s32.totalorder %s32, 3
      %p113 = por %p111, %p112
      %p114 = scmp.ne.s32.totalorder %s106, %s109
      %p115 = scmp.eq.s32.totalorder %s32, 0
      %p116 = por %p114, %p115
      %p117 = scmp.ne.s32.totalorder %s106, %s109
      %p118 = scmp.eq.s32.totalorder %s37, 3
      %p119 = por %p117, %p118
      %p120 = scmp.ne.s32.totalorder %s109, %s110
      %p121 = scmp.eq.s32.totalorder %s37, 0
      %p122 = por %p120, %p121
      %p123 = scmp.ne.s32.totalorder %s109, %s110
      %p124 = scmp.eq.s32.totalorder %s38, 3
      %p125 = por %p123, %p124
      %p127 = scmp.ne.s32.totalorder %s110, %s126
      %p128 = scmp.eq.s32.totalorder %s38, 0
      %p129 = por %p127, %p128
      %s130 = ssub.s32 %s40, %s47
      %p131 = scmp.eq.s32.totalorder %s130, 0
      %s133 = sadd.s32 %s132, 1
      %s134 = scalar_select %p131, %s132, %s133
      %p137 = pneg %p131
      %p138 = scmp.eq.s32.totalorder %s32, 3
      %p139 = por %p137, %p138
      %p140 = scmp.ne.s32.totalorder %s132, %s135
      %p141 = scmp.eq.s32.totalorder %s32, 0
      %p142 = por %p140, %p141
      %p143 = scmp.ne.s32.totalorder %s132, %s135
      %p144 = scmp.eq.s32.totalorder %s37, 3
      %p145 = por %p143, %p144
      %p146 = scmp.ne.s32.totalorder %s135, %s136
      %p147 = scmp.eq.s32.totalorder %s37, 0
      %p148 = por %p146, %p147
      %p149 = scmp.ne.s32.totalorder %s135, %s136
      %p150 = scmp.eq.s32.totalorder %s38, 3
      %p151 = por %p149, %p150
      %p153 = scmp.ne.s32.totalorder %s136, %s152
      %p154 = scmp.eq.s32.totalorder %s38, 0
      %p155 = por %p153, %p154
      %s156 = ssub.s32 %s40, %s47
      %p157 = scmp.eq.s32.totalorder %s156, 0
      %s159 = sadd.s32 %s158, 1
      %s160 = scalar_select %p157, %s158, %s159
      %p163 = pneg %p157
      %p164 = scmp.eq.s32.totalorder %s32, 3
      %p165 = por %p163, %p164
      %p166 = scmp.ne.s32.totalorder %s158, %s161
      %p167 = scmp.eq.s32.totalorder %s32, 0
      %p168 = por %p166, %p167
      %p169 = scmp.ne.s32.totalorder %s158, %s161
      %p170 = scmp.eq.s32.totalorder %s37, 3
      %p171 = por %p169, %p170
      %p172 = scmp.ne.s32.totalorder %s161, %s162
      %p173 = scmp.eq.s32.totalorder %s37, 0
      %p174 = por %p172, %p173
      %p175 = scmp.ne.s32.totalorder %s161, %s162
      %p176 = scmp.eq.s32.totalorder %s38, 3
      %p177 = por %p175, %p176
      %p179 = scmp.ne.s32.totalorder %s162, %s178
      %p180 = scmp.eq.s32.totalorder %s38, 0
      %p181 = por %p179, %p180
      %s182 = ssub.s32 %s40, %s47
      %p183 = scmp.eq.s32.totalorder %s182, 0
      %s185 = sadd.s32 %s184, 1
      %s186 = scalar_select %p183, %s184, %s185
      %p189 = pneg %p183
      %p190 = scmp.eq.s32.totalorder %s32, 3
      %p191 = por %p189, %p190
      %p192 = scmp.ne.s32.totalorder %s184, %s187
      %p193 = scmp.eq.s32.totalorder %s32, 0
      %p194 = por %p192, %p193
      %p195 = scmp.ne.s32.totalorder %s184, %s187
      %p196 = scmp.eq.s32.totalorder %s37, 3
      %p197 = por %p195, %p196
      %p198 = scmp.ne.s32.totalorder %s187, %s188
      %p199 = scmp.eq.s32.totalorder %s37, 0
      %p200 = por %p198, %p199
      %p201 = scmp.ne.s32.totalorder %s187, %s188
      %p202 = scmp.eq.s32.totalorder %s38, 3
      %p203 = por %p201, %p202
      %p205 = scmp.ne.s32.totalorder %s188, %s204
      %p206 = scmp.eq.s32.totalorder %s38, 0
      %p207 = por %p205, %p206
      %s208 = ssub.s32 %s40, %s47
      %p209 = scmp.eq.s32.totalorder %s208, 0
      %s211 = sadd.s32 %s210, 1
      %s212 = scalar_select %p209, %s210, %s211
      %p215 = pneg %p209
      %p216 = scmp.eq.s32.totalorder %s32, 3
      %p217 = por %p215, %p216
      %p218 = scmp.ne.s32.totalorder %s210, %s213
      %p219 = scmp.eq.s32.totalorder %s32, 0
      %p220 = por %p218, %p219
      %p221 = scmp.ne.s32.totalorder %s210, %s213
      %p222 = scmp.eq.s32.totalorder %s37, 3
      %p223 = por %p221, %p222
      %p224 = scmp.ne.s32.totalorder %s213, %s214
      %p225 = scmp.eq.s32.totalorder %s37, 0
      %p226 = por %p224, %p225
      %p227 = scmp.ne.s32.totalorder %s213, %s214
      %p228 = scmp.eq.s32.totalorder %s38, 3
      %p229 = por %p227, %p228
      %p231 = scmp.ne.s32.totalorder %s214, %s230
      %p232 = scmp.eq.s32.totalorder %s38, 0
      %p233 = por %p231, %p232
      %s234 = ssub.s32 %s40, %s47
      %p235 = scmp.eq.s32.totalorder %s234, 0
      %s237 = sadd.s32 %s236, 1
      %s238 = scalar_select %p235, %s236, %s237
      %p241 = pneg %p235
      %p242 = scmp.eq.s32.totalorder %s32, 3
      %p243 = por %p241, %p242
      %p244 = scmp.ne.s32.totalorder %s236, %s239
      %p245 = scmp.eq.s32.totalorder %s32, 0
      %p246 = por %p244, %p245
      %p247 = scmp.ne.s32.totalorder %s236, %s239
      %p248 = scmp.eq.s32.totalorder %s37, 3
      %p249 = por %p247, %p248
      %p250 = scmp.ne.s32.totalorder %s239, %s240
      %p251 = scmp.eq.s32.totalorder %s37, 0
      %p252 = por %p250, %p251
      %p253 = scmp.ne.s32.totalorder %s239, %s240
      %p254 = scmp.eq.s32.totalorder %s38, 3
      %p255 = por %p253, %p254
      %p257 = scmp.ne.s32.totalorder %s240, %s256
      %p258 = scmp.eq.s32.totalorder %s38, 0
      %p259 = por %p257, %p258
      %s260 = ssub.s32 %s40, %s47
      %p261 = scmp.eq.s32.totalorder %s260, 0
      %s263 = sadd.s32 %s262, 1
      %s264 = scalar_select %p261, %s262, %s263
      %p267 = pneg %p261
      %p268 = scmp.eq.s32.totalorder %s32, 3
      %p269 = por %p267, %p268
      %p270 = scmp.ne.s32.totalorder %s262, %s265
      %p271 = scmp.eq.s32.totalorder %s32, 0
      %p272 = por %p270, %p271
      %p273 = scmp.ne.s32.totalorder %s262, %s265
      %p274 = scmp.eq.s32.totalorder %s37, 3
      %p275 = por %p273, %p274
      %p276 = scmp.ne.s32.totalorder %s265, %s266
      %p277 = scmp.eq.s32.totalorder %s37, 0
      %p278 = por %p276, %p277
      %p279 = scmp.ne.s32.totalorder %s265, %s266
      %p280 = scmp.eq.s32.totalorder %s38, 3
      %p281 = por %p279, %p280
      %p283 = scmp.ne.s32.totalorder %s266, %s282
      %p284 = scmp.eq.s32.totalorder %s38, 0
      %p285 = por %p283, %p284
      %s286 = ssub.s32 %s40, %s47
      %p287 = scmp.eq.s32.totalorder %s286, 0
      %s289 = sadd.s32 %s288, 1
      %s290 = scalar_select %p287, %s288, %s289
      %p293 = pneg %p287
      %p294 = scmp.eq.s32.totalorder %s32, 3
      %p295 = por %p293, %p294
      %p296 = scmp.ne.s32.totalorder %s288, %s291
      %p297 = scmp.eq.s32.totalorder %s32, 0
      %p298 = por %p296, %p297
      %p299 = scmp.ne.s32.totalorder %s288, %s291
      %p300 = scmp.eq.s32.totalorder %s37, 3
      %p301 = por %p299, %p300
      %p302 = scmp.ne.s32.totalorder %s291, %s292
      %p303 = scmp.eq.s32.totalorder %s37, 0
      %p304 = por %p302, %p303
      %p305 = scmp.ne.s32.totalorder %s291, %s292
      %p306 = scmp.eq.s32.totalorder %s38, 3
      %p307 = por %p305, %p306
      %p309 = scmp.ne.s32.totalorder %s292, %s308
      %p310 = scmp.eq.s32.totalorder %s38, 0
      %p311 = por %p309, %p310
      %s312 = ssub.s32 %s40, %s47
      %p313 = scmp.eq.s32.totalorder %s312, 0
      %s315 = sadd.s32 %s314, 1
      %s316 = scalar_select %p313, %s314, %s315
      %p319 = pneg %p313
      %p320 = scmp.eq.s32.totalorder %s32, 3
      %p321 = por %p319, %p320
      %p322 = scmp.ne.s32.totalorder %s314, %s317
      %p323 = scmp.eq.s32.totalorder %s32, 0
      %p324 = por %p322, %p323
      %p325 = scmp.ne.s32.totalorder %s314, %s317
      %p326 = scmp.eq.s32.totalorder %s37, 3
      %p327 = por %p325, %p326
      %p328 = scmp.ne.s32.totalorder %s317, %s318
      %p329 = scmp.eq.s32.totalorder %s37, 0
      %p330 = por %p328, %p329
      %p331 = scmp.ne.s32.totalorder %s317, %s318
      %p332 = scmp.eq.s32.totalorder %s38, 3
      %p333 = por %p331, %p332
      %p335 = scmp.ne.s32.totalorder %s318, %s334
      %p336 = scmp.eq.s32.totalorder %s38, 0
      %p337 = por %p335, %p336
      %s338 = ssub.s32 %s40, %s47
      %p339 = scmp.eq.s32.totalorder %s338, 0
      %s341 = sadd.s32 %s340, 1
      %s342 = scalar_select %p339, %s340, %s341
      %p345 = pneg %p339
      %p346 = scmp.eq.s32.totalorder %s32, 3
      %p347 = por %p345, %p346
      %p348 = scmp.ne.s32.totalorder %s340, %s343
      %p349 = scmp.eq.s32.totalorder %s32, 0
      %p350 = por %p348, %p349
      %p351 = scmp.ne.s32.totalorder %s340, %s343
      %p352 = scmp.eq.s32.totalorder %s37, 3
      %p353 = por %p351, %p352
      %p354 = scmp.ne.s32.totalorder %s343, %s344
      %p355 = scmp.eq.s32.totalorder %s37, 0
      %p356 = por %p354, %p355
      %p357 = scmp.ne.s32.totalorder %s343, %s344
      %p358 = scmp.eq.s32.totalorder %s38, 3
      %p359 = por %p357, %p358
      %p361 = scmp.ne.s32.totalorder %s344, %s360
      %p362 = scmp.eq.s32.totalorder %s38, 0
      %p363 = por %p361, %p362
      %s364 = ssub.s32 %s40, %s47
      %p365 = scmp.eq.s32.totalorder %s364, 0
      %s367 = sadd.s32 %s366, 1
      %s368 = scalar_select %p365, %s366, %s367
      %p371 = pneg %p365
      %p372 = scmp.eq.s32.totalorder %s32, 3
      %p373 = por %p371, %p372
      %p374 = scmp.ne.s32.totalorder %s366, %s369
      %p375 = scmp.eq.s32.totalorder %s32, 0
      %p376 = por %p374, %p375
      %p377 = scmp.ne.s32.totalorder %s366, %s369
      %p378 = scmp.eq.s32.totalorder %s37, 3
      %p379 = por %p377, %p378
      %p380 = scmp.ne.s32.totalorder %s369, %s370
      %p381 = scmp.eq.s32.totalorder %s37, 0
      %p382 = por %p380, %p381
      %p383 = scmp.ne.s32.totalorder %s369, %s370
      %p384 = scmp.eq.s32.totalorder %s38, 3
      %p385 = por %p383, %p384
      %p387 = scmp.ne.s32.totalorder %s370, %s386
      %p388 = scmp.eq.s32.totalorder %s38, 0
      %p389 = por %p387, %p388
      %s391 = sadd.s32 %s390, 1
      %p394 = scmp.eq.s32.totalorder %s32, 3
      %p395 = scmp.ne.s32.totalorder %s390, %s392
      %p396 = scmp.eq.s32.totalorder %s32, 0
      %p397 = por %p395, %p396
      %p398 = scmp.ne.s32.totalorder %s390, %s392
      %p399 = scmp.eq.s32.totalorder %s37, 3
      %p400 = por %p398, %p399
      %p401 = scmp.ne.s32.totalorder %s392, %s393
      %p402 = scmp.eq.s32.totalorder %s37, 0
      %p403 = por %p401, %p402
      %p404 = scmp.ne.s32.totalorder %s392, %s393
      %p405 = scmp.eq.s32.totalorder %s38, 3
      %p406 = por %p404, %p405
      %p408 = scmp.ne.s32.totalorder %s393, %s407
      %p409 = scmp.eq.s32.totalorder %s38, 0
      %p410 = por %p408, %p409
      %s412 = sadd.s32 %s411, 1
      %p415 = scmp.eq.s32.totalorder %s32, 3
      %p416 = scmp.ne.s32.totalorder %s411, %s413
      %p417 = scmp.eq.s32.totalorder %s32, 0
      %p418 = por %p416, %p417
      %p419 = scmp.ne.s32.totalorder %s411, %s413
      %p420 = scmp.eq.s32.totalorder %s37, 3
      %p421 = por %p419, %p420
      %p422 = scmp.ne.s32.totalorder %s413, %s414
      %p423 = scmp.eq.s32.totalorder %s37, 0
      %p424 = por %p422, %p423
      %p425 = scmp.ne.s32.totalorder %s413, %s414
      %p426 = scmp.eq.s32.totalorder %s38, 3
      %p427 = por %p425, %p426
      %p429 = scmp.ne.s32.totalorder %s414, %s428
      %p430 = scmp.eq.s32.totalorder %s38, 0
      %p431 = por %p429, %p430
      %s433 = sadd.s32 %s432, 1
      %p436 = scmp.eq.s32.totalorder %s32, 3
      %p437 = scmp.ne.s32.totalorder %s432, %s434
      %p438 = scmp.eq.s32.totalorder %s32, 0
      %p439 = por %p437, %p438
      %p440 = scmp.ne.s32.totalorder %s432, %s434
      %p441 = scmp.eq.s32.totalorder %s37, 3
      %p442 = por %p440, %p441
      %p443 = scmp.ne.s32.totalorder %s434, %s435
      %p444 = scmp.eq.s32.totalorder %s37, 0
      %p445 = por %p443, %p444
      %p446 = scmp.ne.s32.totalorder %s434, %s435
      %p447 = scmp.eq.s32.totalorder %s38, 3
      %p448 = por %p446, %p447
      %p450 = scmp.ne.s32.totalorder %s435, %s449
      %p451 = scmp.eq.s32.totalorder %s38, 0
      %p452 = por %p450, %p451
      %s453 = ssub.s32 %s39, %s51
      %p454 = scmp.eq.s32.totalorder %s453, 0
      %s456 = sadd.s32 %s455, 1
      %s457 = scalar_select %p454, %s455, %s456
      %p460 = pneg %p454
      %p461 = scmp.eq.s32.totalorder %s32, 3
      %p462 = por %p460, %p461
      %p463 = scmp.ne.s32.totalorder %s455, %s458
      %p464 = scmp.eq.s32.totalorder %s32, 0
      %p465 = por %p463, %p464
      %p466 = scmp.ne.s32.totalorder %s455, %s458
      %p467 = scmp.eq.s32.totalorder %s37, 3
      %p468 = por %p466, %p467
      %p469 = scmp.ne.s32.totalorder %s458, %s459
      %p470 = scmp.eq.s32.totalorder %s37, 0
      %p471 = por %p469, %p470
      %p472 = scmp.ne.s32.totalorder %s458, %s459
      %p473 = scmp.eq.s32.totalorder %s38, 3
      %p474 = por %p472, %p473
      %p476 = scmp.ne.s32.totalorder %s459, %s475
      %p477 = scmp.eq.s32.totalorder %s38, 0
      %p478 = por %p476, %p477
      %p479 = scmp.le.s32.totalorder 1, %s32
      %p480 = scmp.lt.s32.totalorder %s32, 5
      %p481 = pnand %p479, %p480
      %p482 = pneg %p481
      // Predicated region
      $region9: #{clip_text_features.1} parent=5 // pred_check
        _
      $region10: #{clip_text_features.1} parent=5 // pred_check_branch
        %484 = sbr.rel (%p481) target = $region12
      $region11: #{clip_text_features.1} parent=5 // pred_region
        %s485 = ssub.s32 %s32, 1
        // Predicated region
        $region13: #{clip_text_features.1} parent=11 // pred_check
          %p486 = pneg %p403
        $region14: #{clip_text_features.1} parent=11 // pred_check_branch
          %488 = sbr.rel (%p486) target = $region16
        $region15: #{clip_text_features.1} parent=11 // pred_region
          _
        $region16: #{clip_text_features.1} parent=11 // pred_fallthru
          _
        // Predicated region
        $region17: #{clip_text_features.1} parent=11 // pred_check
          %p489 = pneg %p424
        $region18: #{clip_text_features.1} parent=11 // pred_check_branch
          %491 = sbr.rel (%p489) target = $region20
        $region19: #{clip_text_features.1} parent=11 // pred_region
          _
        $region20: #{clip_text_features.1} parent=11 // pred_fallthru
          _
        // Predicated region
        $region21: #{clip_text_features.1} parent=11 // pred_check
          %p492 = pneg %p445
        $region22: #{clip_text_features.1} parent=11 // pred_check_branch
          %494 = sbr.rel (%p492) target = $region24
        $region23: #{clip_text_features.1} parent=11 // pred_region
          _
        $region24: #{clip_text_features.1} parent=11 // pred_fallthru
          _
      $region12: #{clip_text_features.1} parent=5 // pred_fallthru
        _
      %p495 = scmp.lt.s32.totalorder %s32, 4
      // Predicated region
      $region25: #{clip_text_features.1} parent=5 // pred_check
        %p496 = pneg %p495
      $region26: #{clip_text_features.1} parent=5 // pred_check_branch
        %498 = sbr.rel (%p496) target = $region28
      $region27: #{clip_text_features.1} parent=5 // pred_region
        // Predicated region
        $region29: #{clip_text_features.1} parent=27 // pred_check
          %p499 = pneg %p64
        $region30: #{clip_text_features.1} parent=27 // pred_check_branch
          %501 = sbr.rel (%p499) target = $region32
        $region31: #{clip_text_features.1} parent=27 // pred_region
          %p502 = scmp.lt.s32.totalorder %s39, 1
          %s503 = scalar_select %p502, %s39, 1
          %s504 = smul.addr %s503, 8
          %s505 = scalar_lea.vmem %s1, %s504
        $region32: #{clip_text_features.1} parent=27 // pred_fallthru
          _
        // Predicated region
        $region33: #{clip_text_features.1} parent=27 // pred_check
          %p506 = pneg %p90
        $region34: #{clip_text_features.1} parent=27 // pred_check_branch
          %508 = sbr.rel (%p506) target = $region36
        $region35: #{clip_text_features.1} parent=27 // pred_region
          %p509 = scmp.lt.s32.totalorder %s40, 1
          %s510 = scalar_select %p509, %s40, 1
          %s511 = scalar_lea.vmem %s2, %s510
        $region36: #{clip_text_features.1} parent=27 // pred_fallthru
          _
        // Predicated region
        $region37: #{clip_text_features.1} parent=27 // pred_check
          %p512 = pneg %p116
        $region38: #{clip_text_features.1} parent=27 // pred_check_branch
          %514 = sbr.rel (%p512) target = $region40
        $region39: #{clip_text_features.1} parent=27 // pred_region
          %p515 = scmp.lt.s32.totalorder %s40, 1
          %s516 = scalar_select %p515, %s40, 1
          %s517 = scalar_lea.vmem %s3, %s516
        $region40: #{clip_text_features.1} parent=27 // pred_fallthru
          _
        // Predicated region
        $region41: #{clip_text_features.1} parent=27 // pred_check
          %p518 = pneg %p142
        $region42: #{clip_text_features.1} parent=27 // pred_check_branch
          %520 = sbr.rel (%p518) target = $region44
        $region43: #{clip_text_features.1} parent=27 // pred_region
          %p521 = scmp.lt.s32.totalorder %s40, 1
          %s522 = scalar_select %p521, %s40, 1
          %s523 = smul.addr %s522, 4
          %s524 = smul.addr %s523, 4
          %s525 = scalar_lea.vmem %s4, %s524
        $region44: #{clip_text_features.1} parent=27 // pred_fallthru
          _
        // Predicated region
        $region45: #{clip_text_features.1} parent=27 // pred_check
          %p526 = pneg %p168
        $region46: #{clip_text_features.1} parent=27 // pred_check_branch
          %528 = sbr.rel (%p526) target = $region48
        $region47: #{clip_text_features.1} parent=27 // pred_region
          %p529 = scmp.lt.s32.totalorder %s40, 1
          %s530 = scalar_select %p529, %s40, 1
          %s531 = scalar_lea.vmem %s5, %s530
        $region48: #{clip_text_features.1} parent=27 // pred_fallthru
          _
        // Predicated region
        $region49: #{clip_text_features.1} parent=27 // pred_check
          %p532 = pneg %p194
        $region50: #{clip_text_features.1} parent=27 // pred_check_branch
          %534 = sbr.rel (%p532) target = $region52
        $region51: #{clip_text_features.1} parent=27 // pred_region
          %p535 = scmp.lt.s32.totalorder %s40, 1
          %s536 = scalar_select %p535, %s40, 1
          %s537 = smul.addr %s536, 4
          %s538 = smul.addr %s537, 4
          %s539 = scalar_lea.vmem %s6, %s538
        $region52: #{clip_text_features.1} parent=27 // pred_fallthru
          _
        // Predicated region
        $region53: #{clip_text_features.1} parent=27 // pred_check
          %p540 = pneg %p220
        $region54: #{clip_text_features.1} parent=27 // pred_check_branch
          %542 = sbr.rel (%p540) target = $region56
        $region55: #{clip_text_features.1} parent=27 // pred_region
          %p543 = scmp.lt.s32.totalorder %s40, 1
          %s544 = scalar_select %p543, %s40, 1
          %s545 = scalar_lea.vmem %s7, %s544
        $region56: #{clip_text_features.1} parent=27 // pred_fallthru
          _
        // Predicated region
        $region57: #{clip_text_features.1} parent=27 // pred_check
          %p546 = pneg %p246
        $region58: #{clip_text_features.1} parent=27 // pred_check_branch
          %548 = sbr.rel (%p546) target = $region60
        $region59: #{clip_text_features.1} parent=27 // pred_region
          %p549 = scmp.lt.s32.totalorder %s40, 1
          %s550 = scalar_select %p549, %s40, 1
          %s551 = scalar_lea.vmem %s8, %s550
        $region60: #{clip_text_features.1} parent=27 // pred_fallthru
          _
        // Predicated region
        $region61: #{clip_text_features.1} parent=27 // pred_check
          %p552 = pneg %p272
        $region62: #{clip_text_features.1} parent=27 // pred_check_branch
          %554 = sbr.rel (%p552) target = $region64
        $region63: #{clip_text_features.1} parent=27 // pred_region
          %p555 = scmp.lt.s32.totalorder %s40, 1
          %s556 = scalar_select %p555, %s40, 1
          %s557 = scalar_lea.vmem %s9, %s556
        $region64: #{clip_text_features.1} parent=27 // pred_fallthru
          _
        // Predicated region
        $region65: #{clip_text_features.1} parent=27 // pred_check
          %p558 = pneg %p298
        $region66: #{clip_text_features.1} parent=27 // pred_check_branch
          %560 = sbr.rel (%p558) target = $region68
        $region67: #{clip_text_features.1} parent=27 // pred_region
          %p561 = scmp.lt.s32.totalorder %s40, 1
          %s562 = scalar_select %p561, %s40, 1
          %s563 = smul.addr %s562, 4
          %s564 = smul.addr %s563, 4
          %s565 = scalar_lea.vmem %s10, %s564
        $region68: #{clip_text_features.1} parent=27 // pred_fallthru
          _
        // Predicated region
        $region69: #{clip_text_features.1} parent=27 // pred_check
          %p566 = pneg %p324
        $region70: #{clip_text_features.1} parent=27 // pred_check_branch
          %568 = sbr.rel (%p566) target = $region72
        $region71: #{clip_text_features.1} parent=27 // pred_region
          %p569 = scmp.lt.s32.totalorder %s40, 1
          %s570 = scalar_select %p569, %s40, 1
          %s571 = scalar_lea.vmem %s11, %s570
        $region72: #{clip_text_features.1} parent=27 // pred_fallthru
          _
        // Predicated region
        $region73: #{clip_text_features.1} parent=27 // pred_check
          %p572 = pneg %p350
        $region74: #{clip_text_features.1} parent=27 // pred_check_branch
          %574 = sbr.rel (%p572) target = $region76
        $region75: #{clip_text_features.1} parent=27 // pred_region
          %p575 = scmp.lt.s32.totalorder %s40, 1
          %s576 = scalar_select %p575, %s40, 1
          %s577 = smul.addr %s576, 16
          %s578 = smul.addr %s577, 4
          %s579 = scalar_lea.vmem %s12, %s578
        $region76: #{clip_text_features.1} parent=27 // pred_fallthru
          _
        // Predicated region
        $region77: #{clip_text_features.1} parent=27 // pred_check
          %p580 = pneg %p376
        $region78: #{clip_text_features.1} parent=27 // pred_check_branch
          %582 = sbr.rel (%p580) target = $region80
        $region79: #{clip_text_features.1} parent=27 // pred_region
          %p583 = scmp.lt.s32.totalorder %s40, 1
          %s584 = scalar_select %p583, %s40, 1
          %s585 = scalar_lea.vmem %s13, %s584
        $region80: #{clip_text_features.1} parent=27 // pred_fallthru
          _
      $region28: #{clip_text_features.1} parent=5 // pred_fallthru
        _
      %p586 = scmp.le.s32.totalorder 1, %s32
      %p587 = scmp.lt.s32.totalorder %s32, 5
      %p588 = pnand %p586, %p587
      %p589 = pneg %p588
      // Predicated region
      $region81: #{clip_text_features.1} parent=5 // pred_check
        _
      $region82: #{clip_text_features.1} parent=5 // pred_check_branch
        %591 = sbr.rel (%p588) target = $region84
      $region83: #{clip_text_features.1} parent=5 // pred_region
        %s592 = ssub.s32 %s32, 1
        %p593 = scmp.lt.s32.totalorder %s41, 1
        %s594 = scalar_select %p593, %s41, 1
        %s595 = smul.addr %s594, 8
        %s596 = scalar_lea.vmem %s1, %s595
        %p597 = pneg %p70
        %p598 = pneg %p67
        %p599 = scmp.lt.s32.totalorder %s42, 1
        %s600 = scalar_select %p599, %s42, 1
        %s601 = scalar_lea.vmem %s2, %s600
        %p602 = pneg %p96
        %p603 = pneg %p93
        %p604 = scmp.lt.s32.totalorder %s42, 1
        %s605 = scalar_select %p604, %s42, 1
        %s606 = scalar_lea.vmem %s3, %s605
        %p607 = pneg %p122
        %p608 = pneg %p119
        %p609 = scmp.lt.s32.totalorder %s42, 1
        %s610 = scalar_select %p609, %s42, 1
        %s611 = smul.addr %s610, 4
        %s612 = smul.addr %s611, 4
        %s613 = scalar_lea.vmem %s4, %s612
        %p614 = pneg %p148
        %p615 = pneg %p145
        %p616 = scmp.lt.s32.totalorder %s42, 1
        %s617 = scalar_select %p616, %s42, 1
        %s618 = scalar_lea.vmem %s5, %s617
        %p619 = pneg %p174
        %p620 = pneg %p171
        %p621 = scmp.lt.s32.totalorder %s42, 1
        %s622 = scalar_select %p621, %s42, 1
        %s623 = smul.addr %s622, 4
        %s624 = smul.addr %s623, 4
        %s625 = scalar_lea.vmem %s6, %s624
        %p626 = pneg %p200
        %p627 = pneg %p197
        %p628 = scmp.lt.s32.totalorder %s42, 1
        %s629 = scalar_select %p628, %s42, 1
        %s630 = scalar_lea.vmem %s7, %s629
        %p631 = pneg %p226
        %p632 = pneg %p223
        %p633 = scmp.lt.s32.totalorder %s42, 1
        %s634 = scalar_select %p633, %s42, 1
        %s635 = scalar_lea.vmem %s8, %s634
        %p636 = pneg %p252
        %p637 = pneg %p249
        %p638 = scmp.lt.s32.totalorder %s42, 1
        %s639 = scalar_select %p638, %s42, 1
        %s640 = scalar_lea.vmem %s9, %s639
        %p641 = pneg %p278
        %p642 = pneg %p275
        %p643 = scmp.lt.s32.totalorder %s42, 1
        %s644 = scalar_select %p643, %s42, 1
        %s645 = smul.addr %s644, 4
        %s646 = smul.addr %s645, 4
        %s647 = scalar_lea.vmem %s10, %s646
        %p648 = pneg %p304
        %p649 = pneg %p301
        %p650 = scmp.lt.s32.totalorder %s42, 1
        %s651 = scalar_select %p650, %s42, 1
        %s652 = scalar_lea.vmem %s11, %s651
        %p653 = pneg %p330
        %p654 = pneg %p327
        %p655 = scmp.lt.s32.totalorder %s42, 1
        %s656 = scalar_select %p655, %s42, 1
        %s657 = smul.addr %s656, 16
        %s658 = smul.addr %s657, 4
        %s659 = scalar_lea.vmem %s12, %s658
        %p660 = pneg %p356
        %p661 = pneg %p353
        %p662 = scmp.lt.s32.totalorder %s42, 1
        %s663 = scalar_select %p662, %s42, 1
        %s664 = scalar_lea.vmem %s13, %s663
        %p665 = pneg %p382
        %p666 = pneg %p379
        %p667 = pneg %p403
        %p668 = pneg %p400
        %p669 = pneg %p424
        %p670 = pneg %p421
        %p671 = pneg %p445
        %p672 = pneg %p442
        %p673 = pneg %p471
        %p674 = pneg %p468
        %s675 = sand.u32 %s458, 1
        %s676 = scalar_lea.sflag [#allocation7], %s675
        %s677 = sand.u32 %s458, 1
        %s678 = scalar_lea.vmem [#allocation6], %s677
        %p679 = scmp.lt.s32.totalorder %s41, 1
        %s680 = scalar_select %p679, %s41, 1
        %s681 = smul.addr %s680, 8
        %s682 = scalar_lea.vmem %s1, %s681
        %p683 = scmp.lt.s32.totalorder %s42, 1
        %s684 = scalar_select %p683, %s42, 1
        %s685 = scalar_lea.vmem %s2, %s684
        %p686 = scmp.lt.s32.totalorder %s42, 1
        %s687 = scalar_select %p686, %s42, 1
        %s688 = scalar_lea.vmem %s3, %s687
        %p689 = scmp.lt.s32.totalorder %s42, 1
        %s690 = scalar_select %p689, %s42, 1
        %s691 = smul.addr %s690, 4
        %s692 = smul.addr %s691, 4
        %s693 = scalar_lea.vmem %s4, %s692
        %p694 = scmp.lt.s32.totalorder %s42, 1
        %s695 = scalar_select %p694, %s42, 1
        %s696 = scalar_lea.vmem %s5, %s695
        %p697 = scmp.lt.s32.totalorder %s42, 1
        %s698 = scalar_select %p697, %s42, 1
        %s699 = smul.addr %s698, 4
        %s700 = smul.addr %s699, 4
        %s701 = scalar_lea.vmem %s6, %s700
        %p702 = scmp.lt.s32.totalorder %s42, 1
        %s703 = scalar_select %p702, %s42, 1
        %s704 = scalar_lea.vmem %s7, %s703
        %p705 = scmp.lt.s32.totalorder %s42, 1
        %s706 = scalar_select %p705, %s42, 1
        %s707 = scalar_lea.vmem %s8, %s706
        %p708 = scmp.lt.s32.totalorder %s42, 1
        %s709 = scalar_select %p708, %s42, 1
        %s710 = scalar_lea.vmem %s9, %s709
        %p711 = scmp.lt.s32.totalorder %s42, 1
        %s712 = scalar_select %p711, %s42, 1
        %s713 = smul.addr %s712, 4
        %s714 = smul.addr %s713, 4
        %s715 = scalar_lea.vmem %s10, %s714
        %p716 = scmp.lt.s32.totalorder %s42, 1
        %s717 = scalar_select %p716, %s42, 1
        %s718 = scalar_lea.vmem %s11, %s717
        %p719 = scmp.lt.s32.totalorder %s42, 1
        %s720 = scalar_select %p719, %s42, 1
        %s721 = smul.addr %s720, 16
        %s722 = smul.addr %s721, 4
        %s723 = scalar_lea.vmem %s12, %s722
        %p724 = scmp.lt.s32.totalorder %s42, 1
        %s725 = scalar_select %p724, %s42, 1
        %s726 = scalar_lea.vmem %s13, %s725
        %p728 = scmp.eq.s32.totalorder %s42, 0
        // Predicated region
        $region85: #{clip_text_features.1} parent=83 // pred_check
          %p729 = pneg %p728
        $region86: #{clip_text_features.1} parent=83 // pred_check_branch
          %731 = sbr.rel (%p729) target = $region88
        $region87: #{clip_text_features.1} parent=83 // pred_region
          %v732 = vld [vmem:[%s682] sm:$0xff]
          %vm733 = vcmask 261120
          %734 = vst.msk [vmem:[#allocation2] sm:$0xff] %vm733, %v732
        $region88: #{clip_text_features.1} parent=83 // pred_fallthru
          _
        %v735 = vld [vmem:[#allocation2] sm:$0xff]
        %v736 = vld [vmem:[%s685] sm:$0x1]
        %v737 = vld [vmem:[%s688] sm:$0x1]
        %vm738 = vcmask 261120
        %v739 = vsel %vm738, %v735, 0.0
        %740 = vadd.xlane.f32.xlu0 %v739
        %v741 = vpop.xlane.xlu0 %740
        %v742 = vrcp.pop 32.0
        %v743 = vmul.f32 %v741, %v742
        %v744 = vsub.f32 %v735, %v743
        %v745 = vmul.f32 %v744, %v744
        %v746 = vsel %vm738, %v745, 0.0
        %747 = vadd.xlane.f32.xlu0 %v746
        %v748 = vpop.xlane.xlu0 %747
        %v749 = vmul.f32 %v748, %v742
        %v750 = vadd.f32 %v749, 1e-05
        %v751 = vrsqrt.pop %v750
        %v752 = vmul.f32 %v744, %v751
        %v754 = vlaneseq
        %v755 = vshrl.u32 %v754, 7
        %v756 = vsub.s32 0, %v755
        %v757 = vrot.slane %v736, %v756
        %v759 = vmul.f32 %v752, %v757
        %v761 = vlaneseq
        %v762 = vshrl.u32 %v761, 7
        %v763 = vsub.s32 0, %v762
        %v764 = vrot.slane %v737, %v763
        %v766 = vadd.f32 %v759, %v764
        %v767 = vpack.c.bf16 %v766, %v766
        %v768 = vld [vmem:[%s693] sm:$0xf]
        %v769 = vld [vmem:[%s693 + $0x4] sm:$0xf]
        %v770 = vld [vmem:[%s693 + $0x8] sm:$0xf]
        %v771 = vld [vmem:[%s693 + $0xc] sm:$0xf]
        %v772 = vld [vmem:[%s696] sm:$0x1]
        %v774 = vlaneseq
        %v775 = vshrl.u32 %v774, 7
        %v776 = vsub.s32 0, %v775
        %v777 = vrot.slane %v772, %v776
        %v783 = vunpack.c.l.b16 %v768
        %v784 = vunpack.c.l.b16 %v769
        %v785 = vunpack.c.l.b16 %v770
        %v786 = vunpack.c.l.b16 %v771
        %v787 = vpack.c.b16 %v784, %v783
        %v788 = vpack.c.b16 %v786, %v785
        %v792 = vsel %vm738, %v767, 0
        %794 = vmatprep.subr.bf16.mxu0 0
        %795 = vmatpush1.bf16.msra.mxu0 0
        %796 = vmatprep.subr.bf16.mxu0 0
        %797 = vmatpush1.bf16.msra.mxu0 0
        %798 = vmatprep.subr.bf16.mxu0 0
        %799 = vmatpush1.bf16.msra.mxu0 0
        %800 = vmatprep.subr.bf16.mxu0 0
        %801 = vmatpush1.bf16.msra.mxu0 0
        %802 = vmatprep.subr.bf16.mxu0 0
        %803 = vmatpush1.bf16.msra.mxu0 0
        %804 = vmatprep.subr.bf16.mxu0 0
        %805 = vmatpush1.bf16.msra.mxu0 0
        %806 = vmatprep.subr.bf16.mxu0 0
        %807 = vmatpush1.bf16.msra.mxu0 %v788
        %808 = vmatprep.subr.bf16.mxu0 0
        %809 = vmatpush1.bf16.msra.mxu0 %v787
        %810 = vmatprep.subr.bf16.mxu0 0
        %811 = vmatpush2.bf16.msra.mxu0 0
        %812 = vmatprep.subr.bf16.mxu0 0
        %813 = vmatpush2.bf16.msra.mxu0 0
        %814 = vmatprep.subr.bf16.mxu0 0
        %815 = vmatpush2.bf16.msra.mxu0 0
        %816 = vmatprep.subr.bf16.mxu0 0
        %817 = vmatpush2.bf16.msra.mxu0 0
        %818 = vmatprep.subr.bf16.mxu0 0
        %819 = vmatpush2.bf16.msra.mxu0 0
        %820 = vmatprep.subr.bf16.mxu0 0
        %821 = vmatpush2.bf16.msra.mxu0 0
        %822 = vmatprep.subr.bf16.mxu0 0
        %823 = vmatpush2.bf16.msra.mxu0 0
        %824 = vmatprep.subr.bf16.mxu0 0
        %825 = vmatpush2.bf16.msra.mxu0 0
        %826 = vmatprep.mubr.bf16.mxu0 0
        %827 = vmatmul.mubr.bf16.gmra.mxu0 %v792
        %v828 = vpop.f32.mrf.mxu0
        %v829 = vadd.f32 %v777, %v828
        %v830 = vpop.f32.mrf.mxu0
        %v831 = vpop.f32.mrf.mxu0
        %v832 = vpop.f32.mrf.mxu0
        %833 = vdwg.mxu0
        %v834 = vlaneseq
        %v835 = vshrl.u32 %v834, 7
        %v836 = vlaneseq
        %v837 = vand.u32 %v836, 127
        %vm838 = vcmp.le.s32.totalorder %v837, %v835
        %v839 = vsel %vm838, 0.0, -1e+09
        %841 = vrot.lane.b32.xlu0 %v829, 96
        %v842 = vpop.permute.xlu0 %841
        %vm843 = vcmask 64512
        %v844 = vsel %vm843, %v829, 0
        %v846 = vsel %vm843, %v842, 0
        %848 = vmatprep.subr.mxu0 0.0
        %849 = vmatpush1.xpose.msra.mxu0 0.0
        %850 = vmatprep.subr.mxu0 0.0
        %851 = vmatpush1.xpose.msra.mxu0 0.0
        %852 = vmatprep.subr.mxu0 0.0
        %853 = vmatpush1.xpose.msra.mxu0 0.0
        %854 = vmatprep.subr.mxu0 0.0
        %855 = vmatpush1.xpose.msra.mxu0 0.0
        %856 = vmatprep.subr.mxu0 0.0
        %857 = vmatpush1.xpose.msra.mxu0 0.0
        %858 = vmatprep.subr.mxu0 0.0
        %859 = vmatpush1.xpose.msra.mxu0 0.0
        %860 = vmatprep.subr.mxu0 0.0
        %861 = vmatpush1.xpose.msra.mxu0 0.0
        %862 = vmatprep.subr.mxu0 0.0
        %863 = vmatpush1.xpose.msra.mxu0 0.0
        %864 = vmatprep.subr.mxu0 0.0
        %865 = vmatpush1.xpose.msra.mxu0 0.0
        %866 = vmatprep.subr.mxu0 0.0
        %867 = vmatpush1.xpose.msra.mxu0 0.0
        %868 = vmatprep.subr.mxu0 0.0
        %869 = vmatpush1.xpose.msra.mxu0 0.0
        %870 = vmatprep.subr.mxu0 0.0
        %871 = vmatpush1.xpose.msra.mxu0 0.0
        %872 = vmatprep.subr.mxu0 0.0
        %873 = vmatpush1.xpose.msra.mxu0 0.0
        %874 = vmatprep.subr.mxu0 0.0
        %875 = vmatpush1.xpose.msra.mxu0 0.0
        %876 = vmatprep.subr.mxu0 0.0
        %877 = vmatpush1.xpose.msra.mxu0 0.0
        %878 = vmatprep.subr.mxu0 0.0
        %879 = vmatpush1.xpose.msra.mxu0 %v846
        %880 = vmatprep.subr.mxu0 0.0
        %881 = vmatpush2.xpose.msra.mxu0 0.0
        %882 = vmatprep.subr.mxu0 0.0
        %883 = vmatpush2.xpose.msra.mxu0 0.0
        %884 = vmatprep.subr.mxu0 0.0
        %885 = vmatpush2.xpose.msra.mxu0 0.0
        %886 = vmatprep.subr.mxu0 0.0
        %887 = vmatpush2.xpose.msra.mxu0 0.0
        %888 = vmatprep.subr.mxu0 0.0
        %889 = vmatpush2.xpose.msra.mxu0 0.0
        %890 = vmatprep.subr.mxu0 0.0
        %891 = vmatpush2.xpose.msra.mxu0 0.0
        %892 = vmatprep.subr.mxu0 0.0
        %893 = vmatpush2.xpose.msra.mxu0 0.0
        %894 = vmatprep.subr.mxu0 0.0
        %895 = vmatpush2.xpose.msra.mxu0 0.0
        %896 = vmatprep.subr.mxu0 0.0
        %897 = vmatpush2.xpose.msra.mxu0 0.0
        %898 = vmatprep.subr.mxu0 0.0
        %899 = vmatpush2.xpose.msra.mxu0 0.0
        %900 = vmatprep.subr.mxu0 0.0
        %901 = vmatpush2.xpose.msra.mxu0 0.0
        %902 = vmatprep.subr.mxu0 0.0
        %903 = vmatpush2.xpose.msra.mxu0 0.0
        %904 = vmatprep.subr.mxu0 0.0
        %905 = vmatpush2.xpose.msra.mxu0 0.0
        %906 = vmatprep.subr.mxu0 0.0
        %907 = vmatpush2.xpose.msra.mxu0 0.0
        %908 = vmatprep.subr.mxu0 0.0
        %909 = vmatpush2.xpose.msra.mxu0 0.0
        %910 = vmatprep.subr.mxu0 0.0
        %911 = vmatpush2.xpose.msra.mxu0 0.0
        %912 = vmatprep.mubr.f32.mxu0 0.0
        %913 = vmatmul.mubr.f32.gmra.mxu0 %v844
        %v914 = vpop.f32.mrf.mxu0
        %v915 = vadd.f32 %v839, %v914
        %v916 = vpop.f32.mrf.mxu0
        %917 = vdwg.mxu0
        %v918 = vsel %vm843, %v915, -inf
        %919 = vmax.xlane.f32.xlu0 %v918
        %v920 = vpop.xlane.xlu0 %919
        %v921 = vsub.f32 %v915, %v920
        %v922 = vmul.f32 %v921, 1.442695
        %v923 = vpow.pop %v922
        %v924 = vsel %vm843, %v923, 0.0
        %925 = vadd.xlane.f32.xlu0 %v924
        %v926 = vpop.xlane.xlu0 %925
        %v927 = vrcp.pop %v926
        %v928 = vmul.f32 %v923, %v927
        %929 = vrot.lane.b32.xlu0 %v829, 64
        %v930 = vpop.permute.xlu0 %929
        %v933 = vsel %vm843, %v928, 0
        %935 = vmatprep.subr.mxu0 0.0
        %936 = vmatpush1.msra.mxu0 0.0
        %937 = vmatprep.subr.mxu0 0.0
        %938 = vmatpush1.msra.mxu0 0.0
        %939 = vmatprep.subr.mxu0 0.0
        %940 = vmatpush1.msra.mxu0 0.0
        %941 = vmatprep.subr.mxu0 0.0
        %942 = vmatpush1.msra.mxu0 0.0
        %943 = vmatprep.subr.mxu0 0.0
        %944 = vmatpush1.msra.mxu0 0.0
        %945 = vmatprep.subr.mxu0 0.0
        %946 = vmatpush1.msra.mxu0 0.0
        %947 = vmatprep.subr.mxu0 0.0
        %948 = vmatpush1.msra.mxu0 0.0
        %949 = vmatprep.subr.mxu0 0.0
        %950 = vmatpush1.msra.mxu0 0.0
        %951 = vmatprep.subr.mxu0 0.0
        %952 = vmatpush1.msra.mxu0 0.0
        %953 = vmatprep.subr.mxu0 0.0
        %954 = vmatpush1.msra.mxu0 0.0
        %955 = vmatprep.subr.mxu0 0.0
        %956 = vmatpush1.msra.mxu0 0.0
        %957 = vmatprep.subr.mxu0 0.0
        %958 = vmatpush1.msra.mxu0 0.0
        %959 = vmatprep.subr.mxu0 0.0
        %960 = vmatpush1.msra.mxu0 0.0
        %961 = vmatprep.subr.mxu0 0.0
        %962 = vmatpush1.msra.mxu0 0.0
        %963 = vmatprep.subr.mxu0 0.0
        %964 = vmatpush1.msra.mxu0 0.0
        %965 = vmatprep.subr.mxu0 0.0
        %966 = vmatpush1.msra.mxu0 %v930
        %967 = vmatprep.subr.mxu0 0.0
        %968 = vmatpush2.msra.mxu0 0.0
        %969 = vmatprep.subr.mxu0 0.0
        %970 = vmatpush2.msra.mxu0 0.0
        %971 = vmatprep.subr.mxu0 0.0
        %972 = vmatpush2.msra.mxu0 0.0
        %973 = vmatprep.subr.mxu0 0.0
        %974 = vmatpush2.msra.mxu0 0.0
        %975 = vmatprep.subr.mxu0 0.0
        %976 = vmatpush2.msra.mxu0 0.0
        %977 = vmatprep.subr.mxu0 0.0
        %978 = vmatpush2.msra.mxu0 0.0
        %979 = vmatprep.subr.mxu0 0.0
        %980 = vmatpush2.msra.mxu0 0.0
        %981 = vmatprep.subr.mxu0 0.0
        %982 = vmatpush2.msra.mxu0 0.0
        %983 = vmatprep.subr.mxu0 0.0
        %984 = vmatpush2.msra.mxu0 0.0
        %985 = vmatprep.subr.mxu0 0.0
        %986 = vmatpush2.msra.mxu0 0.0
        %987 = vmatprep.subr.mxu0 0.0
        %988 = vmatpush2.msra.mxu0 0.0
        %989 = vmatprep.subr.mxu0 0.0
        %990 = vmatpush2.msra.mxu0 0.0
        %991 = vmatprep.subr.mxu0 0.0
        %992 = vmatpush2.msra.mxu0 0.0
        %993 = vmatprep.subr.mxu0 0.0
        %994 = vmatpush2.msra.mxu0 0.0
        %995 = vmatprep.subr.mxu0 0.0
        %996 = vmatpush2.msra.mxu0 0.0
        %997 = vmatprep.subr.mxu0 0.0
        %998 = vmatpush2.msra.mxu0 0.0
        %999 = vmatprep.mubr.f32.mxu0 0.0
        %1000 = vmatmul.mubr.f32.gmra.mxu0 %v933
        %v1001 = vpop.f32.mrf.mxu0
        %v1002 = vadd.f32 0.0, %v1001
        %v1003 = vpop.f32.mrf.mxu0
        %1004 = vdwg.mxu0
        %1005 = vst.msk [vmem:[#allocation3] sm:$0xff] %vm843, %v1002
        %1006 = vrot.lane.b32.xlu0 %v829, 120
        %v1007 = vpop.permute.xlu0 %1006
        %1008 = vrot.lane.b32.xlu0 %v829, 88
        %v1009 = vpop.permute.xlu0 %1008
        %v1010 = vsel %vm843, %v1007, 0
        %v1012 = vsel %vm843, %v1009, 0
        %1014 = vmatprep.subr.mxu0 0.0
        %1015 = vmatpush1.xpose.msra.mxu0 0.0
        %1016 = vmatprep.subr.mxu0 0.0
        %1017 = vmatpush1.xpose.msra.mxu0 0.0
        %1018 = vmatprep.subr.mxu0 0.0
        %1019 = vmatpush1.xpose.msra.mxu0 0.0
        %1020 = vmatprep.subr.mxu0 0.0
        %1021 = vmatpush1.xpose.msra.mxu0 0.0
        %1022 = vmatprep.subr.mxu0 0.0
        %1023 = vmatpush1.xpose.msra.mxu0 0.0
        %1024 = vmatprep.subr.mxu0 0.0
        %1025 = vmatpush1.xpose.msra.mxu0 0.0
        %1026 = vmatprep.subr.mxu0 0.0
        %1027 = vmatpush1.xpose.msra.mxu0 0.0
        %1028 = vmatprep.subr.mxu0 0.0
        %1029 = vmatpush1.xpose.msra.mxu0 0.0
        %1030 = vmatprep.subr.mxu0 0.0
        %1031 = vmatpush1.xpose.msra.mxu0 0.0
        %1032 = vmatprep.subr.mxu0 0.0
        %1033 = vmatpush1.xpose.msra.mxu0 0.0
        %1034 = vmatprep.subr.mxu0 0.0
        %1035 = vmatpush1.xpose.msra.mxu0 0.0
        %1036 = vmatprep.subr.mxu0 0.0
        %1037 = vmatpush1.xpose.msra.mxu0 0.0
        %1038 = vmatprep.subr.mxu0 0.0
        %1039 = vmatpush1.xpose.msra.mxu0 0.0
        %1040 = vmatprep.subr.mxu0 0.0
        %1041 = vmatpush1.xpose.msra.mxu0 0.0
        %1042 = vmatprep.subr.mxu0 0.0
        %1043 = vmatpush1.xpose.msra.mxu0 0.0
        %1044 = vmatprep.subr.mxu0 0.0
        %1045 = vmatpush1.xpose.msra.mxu0 %v1012
        %1046 = vmatprep.subr.mxu0 0.0
        %1047 = vmatpush2.xpose.msra.mxu0 0.0
        %1048 = vmatprep.subr.mxu0 0.0
        %1049 = vmatpush2.xpose.msra.mxu0 0.0
        %1050 = vmatprep.subr.mxu0 0.0
        %1051 = vmatpush2.xpose.msra.mxu0 0.0
        %1052 = vmatprep.subr.mxu0 0.0
        %1053 = vmatpush2.xpose.msra.mxu0 0.0
        %1054 = vmatprep.subr.mxu0 0.0
        %1055 = vmatpush2.xpose.msra.mxu0 0.0
        %1056 = vmatprep.subr.mxu0 0.0
        %1057 = vmatpush2.xpose.msra.mxu0 0.0
        %1058 = vmatprep.subr.mxu0 0.0
        %1059 = vmatpush2.xpose.msra.mxu0 0.0
        %1060 = vmatprep.subr.mxu0 0.0
        %1061 = vmatpush2.xpose.msra.mxu0 0.0
        %1062 = vmatprep.subr.mxu0 0.0
        %1063 = vmatpush2.xpose.msra.mxu0 0.0
        %1064 = vmatprep.subr.mxu0 0.0
        %1065 = vmatpush2.xpose.msra.mxu0 0.0
        %1066 = vmatprep.subr.mxu0 0.0
        %1067 = vmatpush2.xpose.msra.mxu0 0.0
        %1068 = vmatprep.subr.mxu0 0.0
        %1069 = vmatpush2.xpose.msra.mxu0 0.0
        %1070 = vmatprep.subr.mxu0 0.0
        %1071 = vmatpush2.xpose.msra.mxu0 0.0
        %1072 = vmatprep.subr.mxu0 0.0
        %1073 = vmatpush2.xpose.msra.mxu0 0.0
        %1074 = vmatprep.subr.mxu0 0.0
        %1075 = vmatpush2.xpose.msra.mxu0 0.0
        %1076 = vmatprep.subr.mxu0 0.0
        %1077 = vmatpush2.xpose.msra.mxu0 0.0
        %1078 = vmatprep.mubr.f32.mxu0 0.0
        %1079 = vmatmul.mubr.f32.gmra.mxu0 %v1010
        %v1080 = vpop.f32.mrf.mxu0
        %v1081 = vadd.f32 %v839, %v1080
        %v1082 = vpop.f32.mrf.mxu0
        %1083 = vdwg.mxu0
        %v1084 = vsel %vm843, %v1081, -inf
        %1085 = vmax.xlane.f32.xlu0 %v1084
        %v1086 = vpop.xlane.xlu0 %1085
        %v1087 = vsub.f32 %v1081, %v1086
        %v1088 = vmul.f32 %v1087, 1.442695
        %v1089 = vpow.pop %v1088
        %v1090 = vsel %vm843, %v1089, 0.0
        %1091 = vadd.xlane.f32.xlu0 %v1090
        %v1092 = vpop.xlane.xlu0 %1091
        %v1093 = vrcp.pop %v1092
        %v1094 = vmul.f32 %v1089, %v1093
        %1095 = vrot.lane.b32.xlu0 %v829, 56
        %v1096 = vpop.permute.xlu0 %1095
        %v1099 = vsel %vm843, %v1094, 0
        %1101 = vmatprep.subr.mxu0 0.0
        %1102 = vmatpush1.msra.mxu0 0.0
        %1103 = vmatprep.subr.mxu0 0.0
        %1104 = vmatpush1.msra.mxu0 0.0
        %1105 = vmatprep.subr.mxu0 0.0
        %1106 = vmatpush1.msra.mxu0 0.0
        %1107 = vmatprep.subr.mxu0 0.0
        %1108 = vmatpush1.msra.mxu0 0.0
        %1109 = vmatprep.subr.mxu0 0.0
        %1110 = vmatpush1.msra.mxu0 0.0
        %1111 = vmatprep.subr.mxu0 0.0
        %1112 = vmatpush1.msra.mxu0 0.0
        %1113 = vmatprep.subr.mxu0 0.0
        %1114 = vmatpush1.msra.mxu0 0.0
        %1115 = vmatprep.subr.mxu0 0.0
        %1116 = vmatpush1.msra.mxu0 0.0
        %1117 = vmatprep.subr.mxu0 0.0
        %1118 = vmatpush1.msra.mxu0 0.0
        %1119 = vmatprep.subr.mxu0 0.0
        %1120 = vmatpush1.msra.mxu0 0.0
        %1121 = vmatprep.subr.mxu0 0.0
        %1122 = vmatpush1.msra.mxu0 0.0
        %1123 = vmatprep.subr.mxu0 0.0
        %1124 = vmatpush1.msra.mxu0 0.0
        %1125 = vmatprep.subr.mxu0 0.0
        %1126 = vmatpush1.msra.mxu0 0.0
        %1127 = vmatprep.subr.mxu0 0.0
        %1128 = vmatpush1.msra.mxu0 0.0
        %1129 = vmatprep.subr.mxu0 0.0
        %1130 = vmatpush1.msra.mxu0 0.0
        %1131 = vmatprep.subr.mxu0 0.0
        %1132 = vmatpush1.msra.mxu0 %v1096
        %1133 = vmatprep.subr.mxu0 0.0
        %1134 = vmatpush2.msra.mxu0 0.0
        %1135 = vmatprep.subr.mxu0 0.0
        %1136 = vmatpush2.msra.mxu0 0.0
        %1137 = vmatprep.subr.mxu0 0.0
        %1138 = vmatpush2.msra.mxu0 0.0
        %1139 = vmatprep.subr.mxu0 0.0
        %1140 = vmatpush2.msra.mxu0 0.0
        %1141 = vmatprep.subr.mxu0 0.0
        %1142 = vmatpush2.msra.mxu0 0.0
        %1143 = vmatprep.subr.mxu0 0.0
        %1144 = vmatpush2.msra.mxu0 0.0
        %1145 = vmatprep.subr.mxu0 0.0
        %1146 = vmatpush2.msra.mxu0 0.0
        %1147 = vmatprep.subr.mxu0 0.0
        %1148 = vmatpush2.msra.mxu0 0.0
        %1149 = vmatprep.subr.mxu0 0.0
        %1150 = vmatpush2.msra.mxu0 0.0
        %1151 = vmatprep.subr.mxu0 0.0
        %1152 = vmatpush2.msra.mxu0 0.0
        %1153 = vmatprep.subr.mxu0 0.0
        %1154 = vmatpush2.msra.mxu0 0.0
        %1155 = vmatprep.subr.mxu0 0.0
        %1156 = vmatpush2.msra.mxu0 0.0
        %1157 = vmatprep.subr.mxu0 0.0
        %1158 = vmatpush2.msra.mxu0 0.0
        %1159 = vmatprep.subr.mxu0 0.0
        %1160 = vmatpush2.msra.mxu0 0.0
        %1161 = vmatprep.subr.mxu0 0.0
        %1162 = vmatpush2.msra.mxu0 0.0
        %1163 = vmatprep.subr.mxu0 0.0
        %1164 = vmatpush2.msra.mxu0 0.0
        %1165 = vmatprep.mubr.f32.mxu0 0.0
        %1166 = vmatmul.mubr.f32.gmra.mxu0 %v1099
        %v1167 = vpop.f32.mrf.mxu0
        %v1168 = vadd.f32 0.0, %v1167
        %v1169 = vpop.f32.mrf.mxu0
        %1170 = vdwg.mxu0
        %1172 = vrot.lane.b32.xlu0 %v1168, 8
        %v1173 = vpop.permute.xlu0 %1172
        %vm1175 = vcmask 130112
        %1176 = vst.msk [vmem:[#allocation3] sm:$0xff] %vm1175, %v1173
        %1177 = vrot.lane.b32.xlu0 %v829, 112
        %v1178 = vpop.permute.xlu0 %1177
        %1179 = vrot.lane.b32.xlu0 %v829, 80
        %v1180 = vpop.permute.xlu0 %1179
        %v1181 = vsel %vm843, %v1178, 0
        %v1183 = vsel %vm843, %v1180, 0
        %1185 = vmatprep.subr.mxu0 0.0
        %1186 = vmatpush1.xpose.msra.mxu0 0.0
        %1187 = vmatprep.subr.mxu0 0.0
        %1188 = vmatpush1.xpose.msra.mxu0 0.0
        %1189 = vmatprep.subr.mxu0 0.0
        %1190 = vmatpush1.xpose.msra.mxu0 0.0
        %1191 = vmatprep.subr.mxu0 0.0
        %1192 = vmatpush1.xpose.msra.mxu0 0.0
        %1193 = vmatprep.subr.mxu0 0.0
        %1194 = vmatpush1.xpose.msra.mxu0 0.0
        %1195 = vmatprep.subr.mxu0 0.0
        %1196 = vmatpush1.xpose.msra.mxu0 0.0
        %1197 = vmatprep.subr.mxu0 0.0
        %1198 = vmatpush1.xpose.msra.mxu0 0.0
        %1199 = vmatprep.subr.mxu0 0.0
        %1200 = vmatpush1.xpose.msra.mxu0 0.0
        %1201 = vmatprep.subr.mxu0 0.0
        %1202 = vmatpush1.xpose.msra.mxu0 0.0
        %1203 = vmatprep.subr.mxu0 0.0
        %1204 = vmatpush1.xpose.msra.mxu0 0.0
        %1205 = vmatprep.subr.mxu0 0.0
        %1206 = vmatpush1.xpose.msra.mxu0 0.0
        %1207 = vmatprep.subr.mxu0 0.0
        %1208 = vmatpush1.xpose.msra.mxu0 0.0
        %1209 = vmatprep.subr.mxu0 0.0
        %1210 = vmatpush1.xpose.msra.mxu0 0.0
        %1211 = vmatprep.subr.mxu0 0.0
        %1212 = vmatpush1.xpose.msra.mxu0 0.0
        %1213 = vmatprep.subr.mxu0 0.0
        %1214 = vmatpush1.xpose.msra.mxu0 0.0
        %1215 = vmatprep.subr.mxu0 0.0
        %1216 = vmatpush1.xpose.msra.mxu0 %v1183
        %1217 = vmatprep.subr.mxu0 0.0
        %1218 = vmatpush2.xpose.msra.mxu0 0.0
        %1219 = vmatprep.subr.mxu0 0.0
        %1220 = vmatpush2.xpose.msra.mxu0 0.0
        %1221 = vmatprep.subr.mxu0 0.0
        %1222 = vmatpush2.xpose.msra.mxu0 0.0
        %1223 = vmatprep.subr.mxu0 0.0
        %1224 = vmatpush2.xpose.msra.mxu0 0.0
        %1225 = vmatprep.subr.mxu0 0.0
        %1226 = vmatpush2.xpose.msra.mxu0 0.0
        %1227 = vmatprep.subr.mxu0 0.0
        %1228 = vmatpush2.xpose.msra.mxu0 0.0
        %1229 = vmatprep.subr.mxu0 0.0
        %1230 = vmatpush2.xpose.msra.mxu0 0.0
        %1231 = vmatprep.subr.mxu0 0.0
        %1232 = vmatpush2.xpose.msra.mxu0 0.0
        %1233 = vmatprep.subr.mxu0 0.0
        %1234 = vmatpush2.xpose.msra.mxu0 0.0
        %1235 = vmatprep.subr.mxu0 0.0
        %1236 = vmatpush2.xpose.msra.mxu0 0.0
        %1237 = vmatprep.subr.mxu0 0.0
        %1238 = vmatpush2.xpose.msra.mxu0 0.0
        %1239 = vmatprep.subr.mxu0 0.0
        %1240 = vmatpush2.xpose.msra.mxu0 0.0
        %1241 = vmatprep.subr.mxu0 0.0
        %1242 = vmatpush2.xpose.msra.mxu0 0.0
        %1243 = vmatprep.subr.mxu0 0.0
        %1244 = vmatpush2.xpose.msra.mxu0 0.0
        %1245 = vmatprep.subr.mxu0 0.0
        %1246 = vmatpush2.xpose.msra.mxu0 0.0
        %1247 = vmatprep.subr.mxu0 0.0
        %1248 = vmatpush2.xpose.msra.mxu0 0.0
        %1249 = vmatprep.mubr.f32.mxu0 0.0
        %1250 = vmatmul.mubr.f32.gmra.mxu0 %v1181
        %v1251 = vpop.f32.mrf.mxu0
        %v1252 = vadd.f32 %v839, %v1251
        %v1253 = vpop.f32.mrf.mxu0
        %1254 = vdwg.mxu0
        %v1255 = vsel %vm843, %v1252, -inf
        %1256 = vmax.xlane.f32.xlu0 %v1255
        %v1257 = vpop.xlane.xlu0 %1256
        %v1258 = vsub.f32 %v1252, %v1257
        %v1259 = vmul.f32 %v1258, 1.442695
        %v1260 = vpow.pop %v1259
        %v1261 = vsel %vm843, %v1260, 0.0
        %1262 = vadd.xlane.f32.xlu0 %v1261
        %v1263 = vpop.xlane.xlu0 %1262
        %v1264 = vrcp.pop %v1263
        %v1265 = vmul.f32 %v1260, %v1264
        %1266 = vrot.lane.b32.xlu0 %v829, 48
        %v1267 = vpop.permute.xlu0 %1266
        %v1270 = vsel %vm843, %v1265, 0
        %1272 = vmatprep.subr.mxu0 0.0
        %1273 = vmatpush1.msra.mxu0 0.0
        %1274 = vmatprep.subr.mxu0 0.0
        %1275 = vmatpush1.msra.mxu0 0.0
        %1276 = vmatprep.subr.mxu0 0.0
        %1277 = vmatpush1.msra.mxu0 0.0
        %1278 = vmatprep.subr.mxu0 0.0
        %1279 = vmatpush1.msra.mxu0 0.0
        %1280 = vmatprep.subr.mxu0 0.0
        %1281 = vmatpush1.msra.mxu0 0.0
        %1282 = vmatprep.subr.mxu0 0.0
        %1283 = vmatpush1.msra.mxu0 0.0
        %1284 = vmatprep.subr.mxu0 0.0
        %1285 = vmatpush1.msra.mxu0 0.0
        %1286 = vmatprep.subr.mxu0 0.0
        %1287 = vmatpush1.msra.mxu0 0.0
        %1288 = vmatprep.subr.mxu0 0.0
        %1289 = vmatpush1.msra.mxu0 0.0
        %1290 = vmatprep.subr.mxu0 0.0
        %1291 = vmatpush1.msra.mxu0 0.0
        %1292 = vmatprep.subr.mxu0 0.0
        %1293 = vmatpush1.msra.mxu0 0.0
        %1294 = vmatprep.subr.mxu0 0.0
        %1295 = vmatpush1.msra.mxu0 0.0
        %1296 = vmatprep.subr.mxu0 0.0
        %1297 = vmatpush1.msra.mxu0 0.0
        %1298 = vmatprep.subr.mxu0 0.0
        %1299 = vmatpush1.msra.mxu0 0.0
        %1300 = vmatprep.subr.mxu0 0.0
        %1301 = vmatpush1.msra.mxu0 0.0
        %1302 = vmatprep.subr.mxu0 0.0
        %1303 = vmatpush1.msra.mxu0 %v1267
        %1304 = vmatprep.subr.mxu0 0.0
        %1305 = vmatpush2.msra.mxu0 0.0
        %1306 = vmatprep.subr.mxu0 0.0
        %1307 = vmatpush2.msra.mxu0 0.0
        %1308 = vmatprep.subr.mxu0 0.0
        %1309 = vmatpush2.msra.mxu0 0.0
        %1310 = vmatprep.subr.mxu0 0.0
        %1311 = vmatpush2.msra.mxu0 0.0
        %1312 = vmatprep.subr.mxu0 0.0
        %1313 = vmatpush2.msra.mxu0 0.0
        %1314 = vmatprep.subr.mxu0 0.0
        %1315 = vmatpush2.msra.mxu0 0.0
        %1316 = vmatprep.subr.mxu0 0.0
        %1317 = vmatpush2.msra.mxu0 0.0
        %1318 = vmatprep.subr.mxu0 0.0
        %1319 = vmatpush2.msra.mxu0 0.0
        %1320 = vmatprep.subr.mxu0 0.0
        %1321 = vmatpush2.msra.mxu0 0.0
        %1322 = vmatprep.subr.mxu0 0.0
        %1323 = vmatpush2.msra.mxu0 0.0
        %1324 = vmatprep.subr.mxu0 0.0
        %1325 = vmatpush2.msra.mxu0 0.0
        %1326 = vmatprep.subr.mxu0 0.0
        %1327 = vmatpush2.msra.mxu0 0.0
        %1328 = vmatprep.subr.mxu0 0.0
        %1329 = vmatpush2.msra.mxu0 0.0
        %1330 = vmatprep.subr.mxu0 0.0
        %1331 = vmatpush2.msra.mxu0 0.0
        %1332 = vmatprep.subr.mxu0 0.0
        %1333 = vmatpush2.msra.mxu0 0.0
        %1334 = vmatprep.subr.mxu0 0.0
        %1335 = vmatpush2.msra.mxu0 0.0
        %1336 = vmatprep.mubr.f32.mxu0 0.0
        %1337 = vmatmul.mubr.f32.gmra.mxu0 %v1270
        %v1338 = vpop.f32.mrf.mxu0
        %v1339 = vadd.f32 0.0, %v1338
        %v1340 = vpop.f32.mrf.mxu0
        %1341 = vdwg.mxu0
        %1343 = vrot.lane.b32.xlu0 %v1339, 16
        %v1344 = vpop.permute.xlu0 %1343
        %vm1346 = vcmask 195712
        %1347 = vst.msk [vmem:[#allocation3] sm:$0xff] %vm1346, %v1344
        %1348 = vrot.lane.b32.xlu0 %v829, 104
        %v1349 = vpop.permute.xlu0 %1348
        %1350 = vrot.lane.b32.xlu0 %v829, 72
        %v1351 = vpop.permute.xlu0 %1350
        %v1352 = vsel %vm843, %v1349, 0
        %v1354 = vsel %vm843, %v1351, 0
        %1356 = vmatprep.subr.mxu0 0.0
        %1357 = vmatpush1.xpose.msra.mxu0 0.0
        %1358 = vmatprep.subr.mxu0 0.0
        %1359 = vmatpush1.xpose.msra.mxu0 0.0
        %1360 = vmatprep.subr.mxu0 0.0
        %1361 = vmatpush1.xpose.msra.mxu0 0.0
        %1362 = vmatprep.subr.mxu0 0.0
        %1363 = vmatpush1.xpose.msra.mxu0 0.0
        %1364 = vmatprep.subr.mxu0 0.0
        %1365 = vmatpush1.xpose.msra.mxu0 0.0
        %1366 = vmatprep.subr.mxu0 0.0
        %1367 = vmatpush1.xpose.msra.mxu0 0.0
        %1368 = vmatprep.subr.mxu0 0.0
        %1369 = vmatpush1.xpose.msra.mxu0 0.0
        %1370 = vmatprep.subr.mxu0 0.0
        %1371 = vmatpush1.xpose.msra.mxu0 0.0
        %1372 = vmatprep.subr.mxu0 0.0
        %1373 = vmatpush1.xpose.msra.mxu0 0.0
        %1374 = vmatprep.subr.mxu0 0.0
        %1375 = vmatpush1.xpose.msra.mxu0 0.0
        %1376 = vmatprep.subr.mxu0 0.0
        %1377 = vmatpush1.xpose.msra.mxu0 0.0
        %1378 = vmatprep.subr.mxu0 0.0
        %1379 = vmatpush1.xpose.msra.mxu0 0.0
        %1380 = vmatprep.subr.mxu0 0.0
        %1381 = vmatpush1.xpose.msra.mxu0 0.0
        %1382 = vmatprep.subr.mxu0 0.0
        %1383 = vmatpush1.xpose.msra.mxu0 0.0
        %1384 = vmatprep.subr.mxu0 0.0
        %1385 = vmatpush1.xpose.msra.mxu0 0.0
        %1386 = vmatprep.subr.mxu0 0.0
        %1387 = vmatpush1.xpose.msra.mxu0 %v1354
        %1388 = vmatprep.subr.mxu0 0.0
        %1389 = vmatpush2.xpose.msra.mxu0 0.0
        %1390 = vmatprep.subr.mxu0 0.0
        %1391 = vmatpush2.xpose.msra.mxu0 0.0
        %1392 = vmatprep.subr.mxu0 0.0
        %1393 = vmatpush2.xpose.msra.mxu0 0.0
        %1394 = vmatprep.subr.mxu0 0.0
        %1395 = vmatpush2.xpose.msra.mxu0 0.0
        %1396 = vmatprep.subr.mxu0 0.0
        %1397 = vmatpush2.xpose.msra.mxu0 0.0
        %1398 = vmatprep.subr.mxu0 0.0
        %1399 = vmatpush2.xpose.msra.mxu0 0.0
        %1400 = vmatprep.subr.mxu0 0.0
        %1401 = vmatpush2.xpose.msra.mxu0 0.0
        %1402 = vmatprep.subr.mxu0 0.0
        %1403 = vmatpush2.xpose.msra.mxu0 0.0
        %1404 = vmatprep.subr.mxu0 0.0
        %1405 = vmatpush2.xpose.msra.mxu0 0.0
        %1406 = vmatprep.subr.mxu0 0.0
        %1407 = vmatpush2.xpose.msra.mxu0 0.0
        %1408 = vmatprep.subr.mxu0 0.0
        %1409 = vmatpush2.xpose.msra.mxu0 0.0
        %1410 = vmatprep.subr.mxu0 0.0
        %1411 = vmatpush2.xpose.msra.mxu0 0.0
        %1412 = vmatprep.subr.mxu0 0.0
        %1413 = vmatpush2.xpose.msra.mxu0 0.0
        %1414 = vmatprep.subr.mxu0 0.0
        %1415 = vmatpush2.xpose.msra.mxu0 0.0
        %1416 = vmatprep.subr.mxu0 0.0
        %1417 = vmatpush2.xpose.msra.mxu0 0.0
        %1418 = vmatprep.subr.mxu0 0.0
        %1419 = vmatpush2.xpose.msra.mxu0 0.0
        %1420 = vmatprep.mubr.f32.mxu0 0.0
        %1421 = vmatmul.mubr.f32.gmra.mxu0 %v1352
        %v1422 = vpop.f32.mrf.mxu0
        %v1423 = vadd.f32 %v839, %v1422
        %v1424 = vpop.f32.mrf.mxu0
        %1425 = vdwg.mxu0
        %v1426 = vsel %vm843, %v1423, -inf
        %1427 = vmax.xlane.f32.xlu0 %v1426
        %v1428 = vpop.xlane.xlu0 %1427
        %v1429 = vsub.f32 %v1423, %v1428
        %v1430 = vmul.f32 %v1429, 1.442695
        %v1431 = vpow.pop %v1430
        %v1432 = vsel %vm843, %v1431, 0.0
        %1433 = vadd.xlane.f32.xlu0 %v1432
        %v1434 = vpop.xlane.xlu0 %1433
        %v1435 = vrcp.pop %v1434
        %v1436 = vmul.f32 %v1431, %v1435
        %1437 = vrot.lane.b32.xlu0 %v829, 40
        %v1438 = vpop.permute.xlu0 %1437
        %v1441 = vsel %vm843, %v1436, 0
        %1443 = vmatprep.subr.mxu0 0.0
        %1444 = vmatpush1.msra.mxu0 0.0
        %1445 = vmatprep.subr.mxu0 0.0
        %1446 = vmatpush1.msra.mxu0 0.0
        %1447 = vmatprep.subr.mxu0 0.0
        %1448 = vmatpush1.msra.mxu0 0.0
        %1449 = vmatprep.subr.mxu0 0.0
        %1450 = vmatpush1.msra.mxu0 0.0
        %1451 = vmatprep.subr.mxu0 0.0
        %1452 = vmatpush1.msra.mxu0 0.0
        %1453 = vmatprep.subr.mxu0 0.0
        %1454 = vmatpush1.msra.mxu0 0.0
        %1455 = vmatprep.subr.mxu0 0.0
        %1456 = vmatpush1.msra.mxu0 0.0
        %1457 = vmatprep.subr.mxu0 0.0
        %1458 = vmatpush1.msra.mxu0 0.0
        %1459 = vmatprep.subr.mxu0 0.0
        %1460 = vmatpush1.msra.mxu0 0.0
        %1461 = vmatprep.subr.mxu0 0.0
        %1462 = vmatpush1.msra.mxu0 0.0
        %1463 = vmatprep.subr.mxu0 0.0
        %1464 = vmatpush1.msra.mxu0 0.0
        %1465 = vmatprep.subr.mxu0 0.0
        %1466 = vmatpush1.msra.mxu0 0.0
        %1467 = vmatprep.subr.mxu0 0.0
        %1468 = vmatpush1.msra.mxu0 0.0
        %1469 = vmatprep.subr.mxu0 0.0
        %1470 = vmatpush1.msra.mxu0 0.0
        %1471 = vmatprep.subr.mxu0 0.0
        %1472 = vmatpush1.msra.mxu0 0.0
        %1473 = vmatprep.subr.mxu0 0.0
        %1474 = vmatpush1.msra.mxu0 %v1438
        %1475 = vmatprep.subr.mxu0 0.0
        %1476 = vmatpush2.msra.mxu0 0.0
        %1477 = vmatprep.subr.mxu0 0.0
        %1478 = vmatpush2.msra.mxu0 0.0
        %1479 = vmatprep.subr.mxu0 0.0
        %1480 = vmatpush2.msra.mxu0 0.0
        %1481 = vmatprep.subr.mxu0 0.0
        %1482 = vmatpush2.msra.mxu0 0.0
        %1483 = vmatprep.subr.mxu0 0.0
        %1484 = vmatpush2.msra.mxu0 0.0
        %1485 = vmatprep.subr.mxu0 0.0
        %1486 = vmatpush2.msra.mxu0 0.0
        %1487 = vmatprep.subr.mxu0 0.0
        %1488 = vmatpush2.msra.mxu0 0.0
        %1489 = vmatprep.subr.mxu0 0.0
        %1490 = vmatpush2.msra.mxu0 0.0
        %1491 = vmatprep.subr.mxu0 0.0
        %1492 = vmatpush2.msra.mxu0 0.0
        %1493 = vmatprep.subr.mxu0 0.0
        %1494 = vmatpush2.msra.mxu0 0.0
        %1495 = vmatprep.subr.mxu0 0.0
        %1496 = vmatpush2.msra.mxu0 0.0
        %1497 = vmatprep.subr.mxu0 0.0
        %1498 = vmatpush2.msra.mxu0 0.0
        %1499 = vmatprep.subr.mxu0 0.0
        %1500 = vmatpush2.msra.mxu0 0.0
        %1501 = vmatprep.subr.mxu0 0.0
        %1502 = vmatpush2.msra.mxu0 0.0
        %1503 = vmatprep.subr.mxu0 0.0
        %1504 = vmatpush2.msra.mxu0 0.0
        %1505 = vmatprep.subr.mxu0 0.0
        %1506 = vmatpush2.msra.mxu0 0.0
        %1507 = vmatprep.mubr.f32.mxu0 0.0
        %1508 = vmatmul.mubr.f32.gmra.mxu0 %v1441
        %v1509 = vpop.f32.mrf.mxu0
        %v1510 = vadd.f32 0.0, %v1509
        %v1511 = vpop.f32.mrf.mxu0
        %1512 = vdwg.mxu0
        %1514 = vrot.lane.b32.xlu0 %v1510, 24
        %v1515 = vpop.permute.xlu0 %1514
        %vm1517 = vcmask 261312
        %1518 = vst.msk [vmem:[#allocation3] sm:$0xff] %vm1517, %v1515
        %v1519 = vld [vmem:[#allocation3] sm:$0xff]
        %v1520 = vpack.c.bf16 %v1519, %v1519
        %v1521 = vld [vmem:[%s701] sm:$0xf]
        %v1522 = vld [vmem:[%s701 + $0x4] sm:$0xf]
        %v1523 = vld [vmem:[%s701 + $0x8] sm:$0xf]
        %v1524 = vld [vmem:[%s701 + $0xc] sm:$0xf]
        %v1525 = vld [vmem:[%s704] sm:$0x1]
        %v1527 = vlaneseq
        %v1528 = vshrl.u32 %v1527, 7
        %v1529 = vsub.s32 0, %v1528
        %v1530 = vrot.slane %v1525, %v1529
        %v1536 = vunpack.c.l.b16 %v1521
        %v1537 = vunpack.c.l.b16 %v1522
        %v1538 = vunpack.c.l.b16 %v1523
        %v1539 = vunpack.c.l.b16 %v1524
        %v1540 = vpack.c.b16 %v1537, %v1536
        %v1541 = vpack.c.b16 %v1539, %v1538
        %v1545 = vsel %vm738, %v1520, 0
        %1547 = vmatprep.subr.bf16.mxu0 0
        %1548 = vmatpush1.bf16.msra.mxu0 0
        %1549 = vmatprep.subr.bf16.mxu0 0
        %1550 = vmatpush1.bf16.msra.mxu0 0
        %1551 = vmatprep.subr.bf16.mxu0 0
        %1552 = vmatpush1.bf16.msra.mxu0 0
        %1553 = vmatprep.subr.bf16.mxu0 0
        %1554 = vmatpush1.bf16.msra.mxu0 0
        %1555 = vmatprep.subr.bf16.mxu0 0
        %1556 = vmatpush1.bf16.msra.mxu0 0
        %1557 = vmatprep.subr.bf16.mxu0 0
        %1558 = vmatpush1.bf16.msra.mxu0 0
        %1559 = vmatprep.subr.bf16.mxu0 0
        %1560 = vmatpush1.bf16.msra.mxu0 %v1541
        %1561 = vmatprep.subr.bf16.mxu0 0
        %1562 = vmatpush1.bf16.msra.mxu0 %v1540
        %1563 = vmatprep.subr.bf16.mxu0 0
        %1564 = vmatpush2.bf16.msra.mxu0 0
        %1565 = vmatprep.subr.bf16.mxu0 0
        %1566 = vmatpush2.bf16.msra.mxu0 0
        %1567 = vmatprep.subr.bf16.mxu0 0
        %1568 = vmatpush2.bf16.msra.mxu0 0
        %1569 = vmatprep.subr.bf16.mxu0 0
        %1570 = vmatpush2.bf16.msra.mxu0 0
        %1571 = vmatprep.subr.bf16.mxu0 0
        %1572 = vmatpush2.bf16.msra.mxu0 0
        %1573 = vmatprep.subr.bf16.mxu0 0
        %1574 = vmatpush2.bf16.msra.mxu0 0
        %1575 = vmatprep.subr.bf16.mxu0 0
        %1576 = vmatpush2.bf16.msra.mxu0 0
        %1577 = vmatprep.subr.bf16.mxu0 0
        %1578 = vmatpush2.bf16.msra.mxu0 0
        %1579 = vmatprep.mubr.bf16.mxu0 0
        %1580 = vmatmul.mubr.bf16.gmra.mxu0 %v1545
        %v1581 = vpop.f32.mrf.mxu0
        %v1582 = vadd.f32 %v1530, %v1581
        %v1583 = vpop.f32.mrf.mxu0
        %v1584 = vpop.f32.mrf.mxu0
        %v1585 = vpop.f32.mrf.mxu0
        %1586 = vdwg.mxu0
        %v1587 = vadd.f32 %v735, %v1582
        %v1588 = vld [vmem:[%s707] sm:$0x1]
        %v1589 = vld [vmem:[%s710] sm:$0x1]
        %v1590 = vsel %vm738, %v1587, 0.0
        %1591 = vadd.xlane.f32.xlu0 %v1590
        %v1592 = vpop.xlane.xlu0 %1591
        %v1593 = vmul.f32 %v1592, %v742
        %v1594 = vsub.f32 %v1587, %v1593
        %v1595 = vmul.f32 %v1594, %v1594
        %v1596 = vsel %vm738, %v1595, 0.0
        %1597 = vadd.xlane.f32.xlu0 %v1596
        %v1598 = vpop.xlane.xlu0 %1597
        %v1599 = vmul.f32 %v1598, %v742
        %v1600 = vadd.f32 %v1599, 1e-05
        %v1601 = vrsqrt.pop %v1600
        %v1602 = vmul.f32 %v1594, %v1601
        %v1604 = vlaneseq
        %v1605 = vshrl.u32 %v1604, 7
        %v1606 = vsub.s32 0, %v1605
        %v1607 = vrot.slane %v1588, %v1606
        %v1609 = vmul.f32 %v1602, %v1607
        %v1611 = vlaneseq
        %v1612 = vshrl.u32 %v1611, 7
        %v1613 = vsub.s32 0, %v1612
        %v1614 = vrot.slane %v1589, %v1613
        %v1616 = vadd.f32 %v1609, %v1614
        %v1617 = vpack.c.bf16 %v1616, %v1616
        %v1618 = vld [vmem:[%s715] sm:$0xf]
        %v1619 = vld [vmem:[%s715 + $0x4] sm:$0xf]
        %v1620 = vld [vmem:[%s715 + $0x8] sm:$0xf]
        %v1621 = vld [vmem:[%s715 + $0xc] sm:$0xf]
        %v1622 = vld [vmem:[%s718] sm:$0x1]
        %v1624 = vlaneseq
        %v1625 = vshrl.u32 %v1624, 7
        %v1626 = vsub.s32 0, %v1625
        %v1627 = vrot.slane %v1622, %v1626
        %v1633 = vunpack.c.l.b16 %v1618
        %v1634 = vunpack.c.l.b16 %v1619
        %v1635 = vunpack.c.l.b16 %v1620
        %v1636 = vunpack.c.l.b16 %v1621
        %v1637 = vpack.c.b16 %v1634, %v1633
        %v1638 = vpack.c.b16 %v1636, %v1635
        %v1642 = vsel %vm738, %v1617, 0
        %1644 = vmatprep.subr.bf16.mxu0 0
        %1645 = vmatpush1.bf16.msra.mxu0 0
        %1646 = vmatprep.subr.bf16.mxu0 0
        %1647 = vmatpush1.bf16.msra.mxu0 0
        %1648 = vmatprep.subr.bf16.mxu0 0
        %1649 = vmatpush1.bf16.msra.mxu0 0
        %1650 = vmatprep.subr.bf16.mxu0 0
        %1651 = vmatpush1.bf16.msra.mxu0 0
        %1652 = vmatprep.subr.bf16.mxu0 0
        %1653 = vmatpush1.bf16.msra.mxu0 0
        %1654 = vmatprep.subr.bf16.mxu0 0
        %1655 = vmatpush1.bf16.msra.mxu0 0
        %1656 = vmatprep.subr.bf16.mxu0 0
        %1657 = vmatpush1.bf16.msra.mxu0 %v1638
        %1658 = vmatprep.subr.bf16.mxu0 0
        %1659 = vmatpush1.bf16.msra.mxu0 %v1637
        %1660 = vmatprep.subr.bf16.mxu0 0
        %1661 = vmatpush2.bf16.msra.mxu0 0
        %1662 = vmatprep.subr.bf16.mxu0 0
        %1663 = vmatpush2.bf16.msra.mxu0 0
        %1664 = vmatprep.subr.bf16.mxu0 0
        %1665 = vmatpush2.bf16.msra.mxu0 0
        %1666 = vmatprep.subr.bf16.mxu0 0
        %1667 = vmatpush2.bf16.msra.mxu0 0
        %1668 = vmatprep.subr.bf16.mxu0 0
        %1669 = vmatpush2.bf16.msra.mxu0 0
        %1670 = vmatprep.subr.bf16.mxu0 0
        %1671 = vmatpush2.bf16.msra.mxu0 0
        %1672 = vmatprep.subr.bf16.mxu0 0
        %1673 = vmatpush2.bf16.msra.mxu0 0
        %1674 = vmatprep.subr.bf16.mxu0 0
        %1675 = vmatpush2.bf16.msra.mxu0 0
        %1676 = vmatprep.mubr.bf16.mxu0 0
        %1677 = vmatmul.mubr.bf16.gmra.mxu0 %v1642
        %v1678 = vpop.f32.mrf.mxu0
        %v1679 = vadd.f32 %v1627, %v1678
        %v1680 = vpop.f32.mrf.mxu0
        %v1681 = vpop.f32.mrf.mxu0
        %v1682 = vpop.f32.mrf.mxu0
        %1683 = vdwg.mxu0
        %v1684 = vmul.f32 %v1679, 1.702
        %v1685 = vxor.u32 %v1684, 2147483648
        %v1686 = vmul.f32 %v1685, 1.442695
        %v1687 = vpow.pop %v1686
        %v1688 = vadd.f32 %v1687, 1.0
        %v1689 = vrcp.pop %v1688
        %v1690 = vmul.f32 1.0, %v1689
        %v1691 = vmul.f32 %v1679, %v1690
        %v1692 = vpack.c.bf16 %v1691, %v1691
        %v1693 = vld [vmem:[%s723] sm:$0xf]
        %v1694 = vld [vmem:[%s723 + $0x4] sm:$0xf]
        %v1695 = vld [vmem:[%s723 + $0x8] sm:$0xf]
        %v1696 = vld [vmem:[%s723 + $0xc] sm:$0xf]
        %v1697 = vld [vmem:[%s723 + $0x10] sm:$0xf]
        %v1698 = vld [vmem:[%s723 + $0x14] sm:$0xf]
        %v1699 = vld [vmem:[%s723 + $0x18] sm:$0xf]
        %v1700 = vld [vmem:[%s723 + $0x1c] sm:$0xf]
        %v1701 = vld [vmem:[%s723 + $0x20] sm:$0xf]
        %v1702 = vld [vmem:[%s723 + $0x24] sm:$0xf]
        %v1703 = vld [vmem:[%s723 + $0x28] sm:$0xf]
        %v1704 = vld [vmem:[%s723 + $0x2c] sm:$0xf]
        %v1705 = vld [vmem:[%s723 + $0x30] sm:$0xf]
        %v1706 = vld [vmem:[%s723 + $0x34] sm:$0xf]
        %v1707 = vld [vmem:[%s723 + $0x38] sm:$0xf]
        %v1708 = vld [vmem:[%s723 + $0x3c] sm:$0xf]
        %v1709 = vld [vmem:[%s726] sm:$0x1]
        %v1711 = vlaneseq
        %v1712 = vshrl.u32 %v1711, 7
        %v1713 = vsub.s32 0, %v1712
        %v1714 = vrot.slane %v1709, %v1713
        %v1732 = vunpack.c.l.b16 %v1693
        %v1733 = vunpack.c.l.b16 %v1694
        %v1734 = vunpack.c.l.b16 %v1695
        %v1735 = vunpack.c.l.b16 %v1696
        %v1736 = vunpack.c.l.b16 %v1697
        %v1737 = vunpack.c.l.b16 %v1698
        %v1738 = vunpack.c.l.b16 %v1699
        %v1739 = vunpack.c.l.b16 %v1700
        %v1740 = vunpack.c.l.b16 %v1701
        %v1741 = vunpack.c.l.b16 %v1702
        %v1742 = vunpack.c.l.b16 %v1703
        %v1743 = vunpack.c.l.b16 %v1704
        %v1744 = vunpack.c.l.b16 %v1705
        %v1745 = vunpack.c.l.b16 %v1706
        %v1746 = vunpack.c.l.b16 %v1707
        %v1747 = vunpack.c.l.b16 %v1708
        %v1748 = vpack.c.b16 %v1733, %v1732
        %v1749 = vpack.c.b16 %v1735, %v1734
        %v1750 = vpack.c.b16 %v1737, %v1736
        %v1751 = vpack.c.b16 %v1739, %v1738
        %v1752 = vpack.c.b16 %v1741, %v1740
        %v1753 = vpack.c.b16 %v1743, %v1742
        %v1754 = vpack.c.b16 %v1745, %v1744
        %v1755 = vpack.c.b16 %v1747, %v1746
        %1764 = vmatprep.subr.bf16.mxu0 0
        %1765 = vmatpush1.bf16.msra.mxu0 %v1755
        %1766 = vmatprep.subr.bf16.mxu0 0
        %1767 = vmatpush1.bf16.msra.mxu0 %v1754
        %1768 = vmatprep.subr.bf16.mxu0 0
        %1769 = vmatpush1.bf16.msra.mxu0 %v1753
        %1770 = vmatprep.subr.bf16.mxu0 0
        %1771 = vmatpush1.bf16.msra.mxu0 %v1752
        %1772 = vmatprep.subr.bf16.mxu0 0
        %1773 = vmatpush1.bf16.msra.mxu0 %v1751
        %1774 = vmatprep.subr.bf16.mxu0 0
        %1775 = vmatpush1.bf16.msra.mxu0 %v1750
        %1776 = vmatprep.subr.bf16.mxu0 0
        %1777 = vmatpush1.bf16.msra.mxu0 %v1749
        %1778 = vmatprep.subr.bf16.mxu0 0
        %1779 = vmatpush1.bf16.msra.mxu0 %v1748
        %1780 = vmatprep.subr.bf16.mxu0 0
        %1781 = vmatpush2.bf16.msra.mxu0 0
        %1782 = vmatprep.subr.bf16.mxu0 0
        %1783 = vmatpush2.bf16.msra.mxu0 0
        %1784 = vmatprep.subr.bf16.mxu0 0
        %1785 = vmatpush2.bf16.msra.mxu0 0
        %1786 = vmatprep.subr.bf16.mxu0 0
        %1787 = vmatpush2.bf16.msra.mxu0 0
        %1788 = vmatprep.subr.bf16.mxu0 0
        %1789 = vmatpush2.bf16.msra.mxu0 0
        %1790 = vmatprep.subr.bf16.mxu0 0
        %1791 = vmatpush2.bf16.msra.mxu0 0
        %1792 = vmatprep.subr.bf16.mxu0 0
        %1793 = vmatpush2.bf16.msra.mxu0 0
        %1794 = vmatprep.subr.bf16.mxu0 0
        %1795 = vmatpush2.bf16.msra.mxu0 0
        %1796 = vmatprep.mubr.bf16.mxu0 0
        %1797 = vmatmul.mubr.bf16.gmra.mxu0 %v1692
        %v1798 = vpop.f32.mrf.mxu0
        %v1799 = vadd.f32 %v1714, %v1798
        %v1800 = vpop.f32.mrf.mxu0
        %v1801 = vpop.f32.mrf.mxu0
        %v1802 = vpop.f32.mrf.mxu0
        %1803 = vdwg.mxu0
        %v1804 = vadd.f32 %v1587, %v1799
        %1805 = vst.msk [vmem:[#allocation2] sm:$0xff] %vm738, %v1804
        %p1806 = scmp.eq.s32.totalorder %s42, 1
        // Predicated region
        $region89: #{clip_text_features.1} parent=83 // pred_check
          %p1807 = pneg %p1806
        $region90: #{clip_text_features.1} parent=83 // pred_check_branch
          %1809 = sbr.rel (%p1807) target = $region92
        $region91: #{clip_text_features.1} parent=83 // pred_region
          %s1810 = sld [smem:[#allocation5 + %s41]]
          %s1811 = scalar_lea.vmem [#allocation2], %s1810
          %v1812 = vld [vmem:[%s1811] sm:$0x1]
          %v1813 = vld [vmem:[%s14] sm:$0x1]
          %v1814 = vld [vmem:[%s15] sm:$0x1]
          %vm1815 = vcmask 253952
          %v1816 = vsel %vm1815, %v1812, 0.0
          %1817 = vadd.xlane.f32.xlu0 %v1816
          %v1818 = vpop.xlane.xlu0 %1817
          %v1819 = vmul.f32 %v1818, %v742
          %v1820 = vsub.f32 %v1812, %v1819
          %v1821 = vmul.f32 %v1820, %v1820
          %v1822 = vsel %vm1815, %v1821, 0.0
          %1823 = vadd.xlane.f32.xlu0 %v1822
          %v1824 = vpop.xlane.xlu0 %1823
          %v1825 = vmul.f32 %v1824, %v742
          %v1826 = vadd.f32 %v1825, 1e-05
          %v1827 = vrsqrt.pop %v1826
          %v1828 = vmul.f32 %v1820, %v1827
          %v1829 = vmul.f32 %v1828, %v1813
          %v1830 = vadd.f32 %v1829, %v1814
          %v1831 = vpack.c.bf16 %v1830, %v1830
          %v1832 = vld [vmem:[%s16] sm:$0xf]
          %v1833 = vld [vmem:[%s16 + $0x4] sm:$0xf]
          %v1834 = vld [vmem:[%s16 + $0x8] sm:$0xf]
          %v1835 = vld [vmem:[%s16 + $0xc] sm:$0xf]
          %v1840 = vunpack.c.l.b16 %v1832
          %v1841 = vunpack.c.l.b16 %v1833
          %v1842 = vunpack.c.l.b16 %v1834
          %v1843 = vunpack.c.l.b16 %v1835
          %v1844 = vpack.c.b16 %v1841, %v1840
          %v1845 = vpack.c.b16 %v1843, %v1842
          %v1849 = vsel %vm738, %v1831, 0
          %1851 = vmatprep.subr.bf16.mxu0 0
          %1852 = vmatpush1.bf16.msra.mxu0 0
          %1853 = vmatprep.subr.bf16.mxu0 0
          %1854 = vmatpush1.bf16.msra.mxu0 0
          %1855 = vmatprep.subr.bf16.mxu0 0
          %1856 = vmatpush1.bf16.msra.mxu0 0
          %1857 = vmatprep.subr.bf16.mxu0 0
          %1858 = vmatpush1.bf16.msra.mxu0 0
          %1859 = vmatprep.subr.bf16.mxu0 0
          %1860 = vmatpush1.bf16.msra.mxu0 0
          %1861 = vmatprep.subr.bf16.mxu0 0
          %1862 = vmatpush1.bf16.msra.mxu0 0
          %1863 = vmatprep.subr.bf16.mxu0 0
          %1864 = vmatpush1.bf16.msra.mxu0 %v1845
          %1865 = vmatprep.subr.bf16.mxu0 0
          %1866 = vmatpush1.bf16.msra.mxu0 %v1844
          %1867 = vmatprep.subr.bf16.mxu0 0
          %1868 = vmatpush2.bf16.msra.mxu0 0
          %1869 = vmatprep.subr.bf16.mxu0 0
          %1870 = vmatpush2.bf16.msra.mxu0 0
          %1871 = vmatprep.subr.bf16.mxu0 0
          %1872 = vmatpush2.bf16.msra.mxu0 0
          %1873 = vmatprep.subr.bf16.mxu0 0
          %1874 = vmatpush2.bf16.msra.mxu0 0
          %1875 = vmatprep.subr.bf16.mxu0 0
          %1876 = vmatpush2.bf16.msra.mxu0 0
          %1877 = vmatprep.subr.bf16.mxu0 0
          %1878 = vmatpush2.bf16.msra.mxu0 0
          %1879 = vmatprep.subr.bf16.mxu0 0
          %1880 = vmatpush2.bf16.msra.mxu0 0
          %1881 = vmatprep.subr.bf16.mxu0 0
          %1882 = vmatpush2.bf16.msra.mxu0 0
          %1883 = vmatprep.mubr.bf16.mxu0 0
          %1884 = vmatmul.mubr.bf16.gmra.mxu0 %v1849
          %v1885 = vpop.f32.mrf.mxu0
          %v1886 = vadd.f32 0.0, %v1885
          %v1887 = vpop.f32.mrf.mxu0
          %v1888 = vpop.f32.mrf.mxu0
          %v1889 = vpop.f32.mrf.mxu0
          %1890 = vdwg.mxu0
          %1891 = vst.msk [vmem:[%s678] sm:$0x1] %vm1815, %v1886
        $region92: #{clip_text_features.1} parent=83 // pred_fallthru
          _
        %s1892 = sand.u32 %s458, 1
        %s1893 = scalar_lea.sflag [#allocation7], %s1892
        %s1894 = sand.u32 %s458, 1
        %s1895 = scalar_lea.vmem [#allocation6], %s1894
        // Predicated region
        $region93: #{clip_text_features.1} parent=83 // pred_check
          %p1896 = pneg %p468
        $region94: #{clip_text_features.1} parent=83 // pred_check_branch
          %1898 = sbr.rel (%p1896) target = $region96
        $region95: #{clip_text_features.1} parent=83 // pred_region
          %s1900 = ssub.s32 16, 16
          %1901 = vsyncadd %s1893, %s1900
          %s1902 = smul.addr %s41, 16
          %s1903 = scalar_lea.hbm %s17, %s1902
          %s1905 = sshll.u32 %s1895, 4
          %s1906 = int_to_ptr.vmem [resolvable:$true] %s1905
          %1908 = dma.vmem_to_hbm [thread:$0]  %s1906, 16, %s1903, %s1893
        $region96: #{clip_text_features.1} parent=83 // pred_fallthru
          _
      $region84: #{clip_text_features.1} parent=5 // pred_fallthru
        _
      %p1909 = scmp.le.s32.totalorder 2, %s32
      // Predicated region
      $region97: #{clip_text_features.1} parent=5 // pred_check
        %p1910 = pneg %p1909
      $region98: #{clip_text_features.1} parent=5 // pred_check_branch
        %1912 = sbr.rel (%p1910) target = $region100
      $region99: #{clip_text_features.1} parent=5 // pred_region
        %s1913 = ssub.s32 %s32, 2
        // Predicated region
        $region101: #{clip_text_features.1} parent=99 // pred_check
          %p1914 = pneg %p474
        $region102: #{clip_text_features.1} parent=99 // pred_check_branch
          %1916 = sbr.rel (%p1914) target = $region104
        $region103: #{clip_text_features.1} parent=99 // pred_region
          %s1917 = sand.u32 %s459, 1
          %s1918 = scalar_lea.sflag [#allocation7], %s1917
          %s1919 = sand.u32 %s459, 1
          %s1920 = scalar_lea.vmem [#allocation6], %s1919
          %1921 = dma.done %s1918, 16
        $region104: #{clip_text_features.1} parent=99 // pred_fallthru
          _
      $region100: #{clip_text_features.1} parent=5 // pred_fallthru
        _
    $region6: #{clip_text_features.1} parent=1 // loop_footer
      %s36 = sadd.s32 1, %s32
    $region7: #{clip_text_features.1} parent=1 // loop_footer_branch
      %31 = sbr.rel target = $region3
    $region8: #{clip_text_features.1} parent=1 // loop_exit
      _
    %1922 = vsyncpa [#allocation7], 1
    %s1923 = scalar_lea.sflag [#allocation7], 1
    %1924 = vsyncpa %s1923, 1

</llo_original>
